<compile_context>
chip_gen: v7x
topology: tpu7x:2x2x1
jax: 0.10.0
libtpu: 0.0.40
codegen_flags: <defaults>
</compile_context>

<pallas_src>
import functools

import jax
import jax.numpy as jnp
from jax import lax
from jax.experimental import pallas as pl
from jax.experimental.pallas import tpu as pltpu


# ----------------------------------------------------------------------------
# Fused kernel: gather -> (edge_proj + pe_proj + LN) -> depthwise/pointwise
# conv -> scatter-mean -> node/edge output MLPs (+ residuals, edge LN).
# Single whole-array block (empty grid) — everything fits in VMEM at these
# shapes.
# ----------------------------------------------------------------------------
def _fused_walk_encoder_kernel(
        d_conv, walk_len, matmul_dtype,
        # data
        x_ref, ea_ref, pe_ref,
        # walk index one-hot sources + edge-scatter mask
        nidx_col_ref, nidx_row_ref, eidx_col_ref, eidx_row_ref, emask_ref,
        # parameters
        edge_w_ref, pe_w_ref, b_fused_ref, ln_g_ref, ln_b_ref,
        dw_w_ref, dw_b_ref, pw_w_ref, pw_b_ref,
        n_w1_ref, n_b1_ref, n_w2_ref, n_b2_ref,
        e_w1_ref, e_b1_ref, e_w2_ref, e_b2_ref,
        e_ln_g_ref, e_ln_b_ref,
        # outputs
        xo_ref, eo_ref,
        # scratch
        xpad_ref):
    f32 = jnp.float32
    N, H = x_ref.shape
    E = ea_ref.shape[0]
    WL = nidx_col_ref.shape[0]
    L = walk_len
    W = WL // L
    pad = d_conv // 2

    def mm(a, b):
        # weight matmuls: (optionally bf16) MXU operands, f32 accumulation
        return jnp.dot(a.astype(matmul_dtype), b.astype(matmul_dtype),
                       preferred_element_type=f32)

    def mm_exact(a, b):
        # one-hot gather / scatter matmuls stay f32 (exact data movement)
        return jnp.dot(a, b, preferred_element_type=f32)

    # ---- one-hot gather matrices (built once from int32 index vectors) ----
    oh_node_g = (nidx_col_ref[...] ==
                 lax.broadcasted_iota(jnp.int32, (WL, N), 1)).astype(f32)
    oh_edge_g = (eidx_col_ref[...] ==
                 lax.broadcasted_iota(jnp.int32, (WL, E), 1)).astype(f32)

    # edge_proj applied to all edges first: gather(ea) @ W_e == gather(ea @ W_e)
    ea_proj = mm(ea_ref[...], edge_w_ref[...])                      # (E, H)

    # walk_x = x[walk_node_index] + edge_proj(edge_attr[walk_edge_index])
    #          + walk_pe_proj(walk_pe)            (biases pre-summed: b_fused)
    walk_x = mm_exact(oh_node_g, x_ref[...])                        # (WL, H)
    walk_x = walk_x + mm_exact(oh_edge_g, ea_proj)
    walk_x = walk_x + mm(pe_ref[...], pe_w_ref[...]) + b_fused_ref[...]

    # ---- encoder LayerNorm (eps=1e-5) over hidden ----
    mu = jnp.mean(walk_x, axis=-1, keepdims=True)
    var = jnp.mean((walk_x - mu) ** 2, axis=-1, keepdims=True)
    walk_x = (walk_x - mu) * lax.rsqrt(var + 1e-5) * ln_g_ref[...] + ln_b_ref[...]

    # ---- depthwise Conv1d along walk positions (kernel=d_conv, pad=d_conv//2,
    # groups=H).  Padded activation staged ONCE in VMEM scratch; each tap is an
    # offset ref load (no per-tap value-slice relayouts). ----
    xpad_ref[...] = jnp.zeros_like(xpad_ref)
    xpad_ref[:, pad:pad + L, :] = walk_x.reshape(W, L, H)
    dw_w = dw_w_ref[...]                                            # (d_conv, H)
    y = jnp.zeros((W, L, H), f32)
    for k in range(d_conv):                                         # static unroll
        y = y + xpad_ref[:, k:k + L, :] * dw_w[k]
    y = jnp.maximum(y + dw_b_ref[...], 0.0)

    # ---- pointwise (1x1) Conv1d + ReLU ----
    walk_out = jnp.maximum(mm(y.reshape(WL, H), pw_w_ref[...]) + pw_b_ref[...],
                           0.0)                                     # (WL, H)

    # ---- scatter-mean via transposed one-hot MXU matmuls ----
    def scatter_mean(oh_s, vals):
        s = mm_exact(oh_s, vals)
        cnt = jnp.maximum(jnp.sum(oh_s, axis=1, keepdims=True), 1.0)
        inv = pl.reciprocal(cnt, approx=True)          # divide on the EUP slot
        inv = inv * (2.0 - cnt * inv)                  # one Newton step -> f32 accuracy
        return s * inv

    oh_node_s = (lax.broadcasted_iota(jnp.int32, (N, WL), 0) ==
                 nidx_row_ref[...]).astype(f32)
    node_agg = scatter_mean(oh_node_s, walk_out)                    # (N, H)

    # edge scatter only uses walk positions 0..L-2 (walk_out[:, :-1])
    oh_edge_s = (lax.broadcasted_iota(jnp.int32, (E, WL), 0) ==
                 eidx_row_ref[...]).astype(f32) * emask_ref[...]
    edge_agg = scatter_mean(oh_edge_s, walk_out)                    # (E, H)

    # ---- node output MLP + residual ----
    h = jnp.maximum(mm(node_agg, n_w1_ref[...]) + n_b1_ref[...], 0.0)
    xo_ref[...] = x_ref[...] + mm(h, n_w2_ref[...]) + n_b2_ref[...]

    # ---- edge output MLP + residual + edge LayerNorm ----
    he = jnp.maximum(mm(edge_agg, e_w1_ref[...]) + e_b1_ref[...], 0.0)
    e = ea_ref[...] + mm(he, e_w2_ref[...]) + e_b2_ref[...]
    mu_e = jnp.mean(e, axis=-1, keepdims=True)
    var_e = jnp.mean((e - mu_e) ** 2, axis=-1, keepdims=True)
    eo_ref[...] = ((e - mu_e) * lax.rsqrt(var_e + 1e-5)
                   * e_ln_g_ref[...] + e_ln_b_ref[...])


# ----------------------------------------------------------------------------
# Wrapper: WalkEncoder.forward
# ----------------------------------------------------------------------------
def walk_encoder_forward(params, x, edge_index, walk_node_index, walk_edge_index,
                         walk_pe, num_nodes, edge_attr, use_bf16_matmuls=True):
    f32 = jnp.float32
    x = x.astype(f32)
    edge_attr = edge_attr.astype(f32)
    walk_pe = walk_pe.astype(f32)

    H = x.shape[-1]
    W, L = walk_node_index.shape
    WL = W * L
    N = num_nodes
    E = edge_index.shape[-1]
    PE = walk_pe.shape[-1]
    PEp = params['pe_proj_w_pad'].shape[0]
    d_conv = params['conv_dw_w'].shape[0]
    pad = d_conv // 2
    assert d_conv % 2 == 1, "padding=d_conv//2 reproduces PyTorch only for odd d_conv"
    matmul_dtype = jnp.bfloat16 if use_bf16_matmuls else jnp.float32

    # Tiny wrapper glue (XLA): flatten/pad walk_pe and lay the walk indices out
    # in the row / column orientations the kernel's one-hot builders need.
    pe_flat = jnp.pad(walk_pe.reshape(WL, PE), ((0, 0), (0, PEp - PE)))
    nidx = walk_node_index.reshape(-1).astype(jnp.int32)
    eidx = walk_edge_index.reshape(-1).astype(jnp.int32)
    nidx_col = nidx.reshape(WL, 1)
    nidx_row = nidx.reshape(1, WL)
    eidx_col = eidx.reshape(WL, 1)
    eidx_row = eidx.reshape(1, WL)
    emask = (jnp.arange(WL, dtype=jnp.int32) % L < (L - 1)).astype(f32).reshape(1, WL)

    # Advisory cost estimate (MXU matmuls + elementwise + transcendentals).
    mxu_flops = 2 * (E * H * H + WL * N * H + WL * E * H + WL * PEp * H
                     + WL * H * H + N * WL * H + E * WL * H
                     + 2 * N * H * H + 2 * E * H * H)
    vpu_flops = WL * H * (2 * d_conv + 12) + (N + E) * H * 10
    bytes_accessed = 4 * (2 * N * H + 2 * E * H + WL * PEp + 5 * WL
                          + 12 * H * H + PEp * H + d_conv * H + 12 * H)
    cost = pl.CostEstimate(flops=int(mxu_flops + vpu_flops),
                           transcendentals=int(WL + N + 2 * E),
                           bytes_accessed=int(bytes_accessed))

    kernel = functools.partial(_fused_walk_encoder_kernel, d_conv, L, matmul_dtype)

    # TODO(synk): when W / num_nodes / E scale, switch to a ("parallel", ...)
    # grid over walks and output rows (tiles sized for v7x's 64 MiB VMEM / 2 TCs)
    # and pad contraction dims toward 128 for v5e's MXU.
    # TODO(synk): final outputs keep H=32 lanes (masked vst); a lane-dense
    # (rows, k*128) out_spec needs an in-kernel lane-folding reshape that Mosaic
    # may relayout — deferred since the fusion already removed the walk_out HBM
    # round trip and the remaining output payload is ~9 KB.
    x_out, edge_out = pl.pallas_call(
        kernel,
        out_shape=(jax.ShapeDtypeStruct((N, H), f32),
                   jax.ShapeDtypeStruct((E, H), f32)),
        scratch_shapes=[pltpu.VMEM((W, L + 2 * pad, H), f32)],
        compiler_params=pltpu.CompilerParams(vmem_limit_bytes=8 * 1024 * 1024),
        cost_estimate=cost,
    )(x, edge_attr, pe_flat,
      nidx_col, nidx_row, eidx_col, eidx_row, emask,
      params['edge_proj_w'], params['pe_proj_w_pad'], params['b_fused'],
      params['ln_g'], params['ln_b'],
      params['conv_dw_w'], params['conv_dw_b'],
      params['conv_pw_w'], params['conv_pw_b'],
      params['node_w1'], params['node_b1'], params['node_w2'], params['node_b2'],
      params['edge_w1'], params['edge_b1'], params['edge_w2'], params['edge_b2'],
      params['edge_ln_g'], params['edge_ln_b'])
    return x_out, edge_out


# ----------------------------------------------------------------------------
# One-time parameter packing (perf review: build fused / padded weights at
# parameter-prep time, not inside every forward call).
# ----------------------------------------------------------------------------
def prepare_params(params):
    p = dict(params)
    PE = params['pe_proj_w'].shape[0]
    PEp = ((PE + 7) // 8) * 8
    p['pe_proj_w_pad'] = jnp.pad(params['pe_proj_w'], ((0, PEp - PE), (0, 0)))
    p['b_fused'] = params['edge_proj_b'] + params['pe_proj_b']
    return p


# ----------------------------------------------------------------------------
# Pure-JAX reference (same math, no Pallas).  matmul_dtype lets the reference
# mirror the kernel's bf16 MXU-operand mode for a matched-precision check.
# ----------------------------------------------------------------------------
def _reference_forward(params, x, edge_index, walk_node_index, walk_edge_index,
                       walk_pe, num_nodes, edge_attr, matmul_dtype=jnp.float32):
    f32 = jnp.float32
    H = x.shape[-1]
    E = edge_index.shape[-1]
    L = walk_node_index.shape[1]
    d_conv = params['conv_dw_w'].shape[0]

    if matmul_dtype is jnp.float32:
        def mm(a, b):
            return jnp.dot(a, b, precision=jax.lax.Precision.HIGHEST)
    else:
        def mm(a, b):
            return jnp.dot(a.astype(matmul_dtype), b.astype(matmul_dtype),
                           preferred_element_type=f32)

    wx = x[walk_node_index]
    wx = wx + mm(edge_attr[walk_edge_index], params['edge_proj_w']) + params['edge_proj_b']
    wx = wx + mm(walk_pe, params['pe_proj_w']) + params['pe_proj_b']
    mu = jnp.mean(wx, -1, keepdims=True)
    var = jnp.mean((wx - mu) ** 2, -1, keepdims=True)
    wx = (wx - mu) * jax.lax.rsqrt(var + 1e-5) * params['ln_g'] + params['ln_b']

    pad = d_conv // 2
    padded = jnp.pad(wx, ((0, 0), (pad, pad), (0, 0)))
    y = jnp.zeros_like(wx)
    for k in range(d_conv):
        y = y + padded[:, k:k + L, :] * params['conv_dw_w'][k]
    y = jnp.maximum(y + params['conv_dw_b'], 0.0)
    z = jnp.maximum(mm(y, params['conv_pw_w']) + params['conv_pw_b'], 0.0)

    flat = z.reshape(-1, H)
    idx = walk_node_index.reshape(-1)
    ns = jnp.zeros((num_nodes, H), f32).at[idx].add(flat)
    nc = jnp.zeros((num_nodes,), f32).at[idx].add(1.0)
    node_agg = ns / jnp.maximum(nc, 1.0)[:, None]
    h = jnp.maximum(mm(node_agg, params['node_w1']) + params['node_b1'], 0.0)
    x_out = x + mm(h, params['node_w2']) + params['node_b2']

    ev = z[:, :-1].reshape(-1, H)
    ei = walk_edge_index[:, :-1].reshape(-1)
    es = jnp.zeros((E, H), f32).at[ei].add(ev)
    ec = jnp.zeros((E,), f32).at[ei].add(1.0)
    edge_agg = es / jnp.maximum(ec, 1.0)[:, None]
    he = jnp.maximum(mm(edge_agg, params['edge_w1']) + params['edge_b1'], 0.0)
    e = edge_attr + mm(he, params['edge_w2']) + params['edge_b2']
    mu = jnp.mean(e, -1, keepdims=True)
    var = jnp.mean((e - mu) ** 2, -1, keepdims=True)
    e = (e - mu) * jax.lax.rsqrt(var + 1e-5) * params['edge_ln_g'] + params['edge_ln_b']
    return x_out, e


# ----------------------------------------------------------------------------
# Deterministic parameter init (shapes from WalkEncoder.__init__).
# PyTorch Linear weights are [out, in]; stored transposed as [in, out].
# Depthwise Conv1d weight [H, 1, d_conv] stored as [d_conv, H];
# pointwise Conv1d weight [H, H, 1] stored as [in, out].
# NOTE(synk): PyTorch Conv1d is cross-correlation; when importing real
# checkpoints map weight[c, 0, k] -> conv_dw_w[k, c] WITHOUT reversing k.
# ----------------------------------------------------------------------------
def init_params(key, H, PE, d_conv):
    ks = jax.random.split(key, 16)

    def lin_w(k, fi, fo):
        return jax.random.normal(k, (fi, fo), jnp.float32) / jnp.sqrt(float(fi))

    def bias(k, fo):
        return 0.01 * jax.random.normal(k, (1, fo), jnp.float32)

    p = {}
    p['edge_proj_w'] = lin_w(ks[0], H, H)
    p['edge_proj_b'] = bias(ks[1], H)
    p['pe_proj_w'] = lin_w(ks[2], PE, H)
    p['pe_proj_b'] = bias(ks[3], H)
    p['ln_g'] = jnp.ones((1, H), jnp.float32)
    p['ln_b'] = jnp.zeros((1, H), jnp.float32)
    p['conv_dw_w'] = jax.random.normal(ks[4], (d_conv, H), jnp.float32) / jnp.sqrt(float(d_conv))
    p['conv_dw_b'] = bias(ks[5], H)
    p['conv_pw_w'] = lin_w(ks[6], H, H)
    p['conv_pw_b'] = bias(ks[7], H)
    p['node_w1'] = lin_w(ks[8], H, H)
    p['node_b1'] = bias(ks[9], H)
    p['node_w2'] = lin_w(ks[10], H, H)
    p['node_b2'] = bias(ks[11], H)
    p['edge_w1'] = lin_w(ks[12], H, H)
    p['edge_b1'] = bias(ks[13], H)
    p['edge_w2'] = lin_w(ks[14], H, H)
    p['edge_b2'] = bias(ks[15], H)
    p['edge_ln_g'] = jnp.ones((1, H), jnp.float32)
    p['edge_ln_b'] = jnp.zeros((1, H), jnp.float32)
    return p


if __name__ == "__main__":
    key = jax.random.PRNGKey(0)
    H = 32               # hidden_size
    num_nodes = 32
    num_edges = 40
    W, L = 8, 8          # num_walks, walk_length
    window_size = 8
    PE = 2 * window_size - 1   # walk_pe_dim = 15
    d_conv = 9

    k_param, kx, ke, kei, kwn, kwe, kpe = jax.random.split(key, 7)
    params = init_params(k_param, H, PE, d_conv)
    prepared = prepare_params(params)        # one-time weight packing

    x = jax.random.normal(kx, (num_nodes, H), jnp.float32)
    edge_attr = jax.random.normal(ke, (num_edges, H), jnp.float32)
    edge_index = jax.random.randint(kei, (2, num_edges), 0, num_nodes)   # only shape used
    walk_node_index = jax.random.randint(kwn, (W, L), 0, num_nodes)
    walk_edge_index = jax.random.randint(kwe, (W, L), 0, num_edges)
    walk_pe = jax.random.normal(kpe, (W, L, PE), jnp.float32)

    fwd = jax.jit(walk_encoder_forward,
                  static_argnames=("num_nodes", "use_bf16_matmuls"))

    # --- fp32-matmul path: strict check against the fp32 reference ---
    x32, e32 = fwd(prepared, x, edge_index, walk_node_index, walk_edge_index,
                   walk_pe, num_nodes=num_nodes, edge_attr=edge_attr,
                   use_bf16_matmuls=False)
    jax.block_until_ready((x32, e32))
    assert x32.shape == (num_nodes, H) and e32.shape == (num_edges, H)
    xr, er = _reference_forward(params, x, edge_index, walk_node_index,
                                walk_edge_index, walk_pe, num_nodes, edge_attr,
                                matmul_dtype=jnp.float32)
    assert bool(jnp.allclose(x32, xr, atol=2e-3, rtol=2e-3))
    assert bool(jnp.allclose(e32, er, atol=2e-3, rtol=2e-3))

    # --- bf16 MXU-operand path (default perf config): matched-precision check ---
    xb, eb = fwd(prepared, x, edge_index, walk_node_index, walk_edge_index,
                 walk_pe, num_nodes=num_nodes, edge_attr=edge_attr,
                 use_bf16_matmuls=True)
    jax.block_until_ready((xb, eb))
    xrb, erb = _reference_forward(params, x, edge_index, walk_node_index,
                                  walk_edge_index, walk_pe, num_nodes, edge_attr,
                                  matmul_dtype=jnp.bfloat16)
    assert bool(jnp.allclose(xb, xrb, atol=2e-3, rtol=2e-3))
    assert bool(jnp.allclose(eb, erb, atol=2e-3, rtol=2e-3))

    print("KERNEL_OK")
</pallas_src>

<mosaic_0001>
module attributes {stable_mosaic.version = 11 : i64} {
  func.func @_fused_walk_encoder_kernel(%arg0: memref<32x32xf32, #tpu.memory_space<vmem>>, %arg1: memref<40x32xf32, #tpu.memory_space<vmem>>, %arg2: memref<64x16xf32, #tpu.memory_space<vmem>>, %arg3: memref<64x1xi32, #tpu.memory_space<vmem>>, %arg4: memref<1x64xi32, #tpu.memory_space<vmem>>, %arg5: memref<64x1xi32, #tpu.memory_space<vmem>>, %arg6: memref<1x64xi32, #tpu.memory_space<vmem>>, %arg7: memref<1x64xf32, #tpu.memory_space<vmem>>, %arg8: memref<32x32xf32, #tpu.memory_space<vmem>>, %arg9: memref<16x32xf32, #tpu.memory_space<vmem>>, %arg10: memref<1x32xf32, #tpu.memory_space<vmem>>, %arg11: memref<1x32xf32, #tpu.memory_space<vmem>>, %arg12: memref<1x32xf32, #tpu.memory_space<vmem>>, %arg13: memref<9x32xf32, #tpu.memory_space<vmem>>, %arg14: memref<1x32xf32, #tpu.memory_space<vmem>>, %arg15: memref<32x32xf32, #tpu.memory_space<vmem>>, %arg16: memref<1x32xf32, #tpu.memory_space<vmem>>, %arg17: memref<32x32xf32, #tpu.memory_space<vmem>>, %arg18: memref<1x32xf32, #tpu.memory_space<vmem>>, %arg19: memref<32x32xf32, #tpu.memory_space<vmem>>, %arg20: memref<1x32xf32, #tpu.memory_space<vmem>>, %arg21: memref<32x32xf32, #tpu.memory_space<vmem>>, %arg22: memref<1x32xf32, #tpu.memory_space<vmem>>, %arg23: memref<32x32xf32, #tpu.memory_space<vmem>>, %arg24: memref<1x32xf32, #tpu.memory_space<vmem>>, %arg25: memref<1x32xf32, #tpu.memory_space<vmem>>, %arg26: memref<1x32xf32, #tpu.memory_space<vmem>>, %arg27: memref<32x32xf32, #tpu.memory_space<vmem>>, %arg28: memref<40x32xf32, #tpu.memory_space<vmem>>, %arg29: memref<8x16x32xf32, #tpu.memory_space<vmem>>) attributes {dimension_semantics = [], scalar_prefetch = 0 : i64, scratch_operands = 1 : i64, tpu.core_type = #tpu.core_type<tc>} {
    %c0 = arith.constant 0 : index
    %c0_0 = arith.constant 0 : index
    %0 = vector.load %arg3[%c0, %c0_0] : memref<64x1xi32, #tpu.memory_space<vmem>>, vector<64x1xi32>
    %1 = tpu.iota {dimensions = array<i32: 1>} : vector<64x32xi32>
    %2 = vector.broadcast %0 : vector<64x1xi32> to vector<64x32xi32>
    %3 = arith.cmpi eq, %2, %1 : vector<64x32xi32>
    %4 = arith.extui %3 : vector<64x32xi1> to vector<64x32xi32>
    %5 = arith.sitofp %4 : vector<64x32xi32> to vector<64x32xf32>
    %c0_1 = arith.constant 0 : index
    %c0_2 = arith.constant 0 : index
    %6 = vector.load %arg5[%c0_1, %c0_2] : memref<64x1xi32, #tpu.memory_space<vmem>>, vector<64x1xi32>
    %7 = tpu.iota {dimensions = array<i32: 1>} : vector<64x40xi32>
    %8 = vector.broadcast %6 : vector<64x1xi32> to vector<64x40xi32>
    %9 = arith.cmpi eq, %8, %7 : vector<64x40xi32>
    %10 = arith.extui %9 : vector<64x40xi1> to vector<64x40xi32>
    %11 = arith.sitofp %10 : vector<64x40xi32> to vector<64x40xf32>
    %c0_3 = arith.constant 0 : index
    %c0_4 = arith.constant 0 : index
    %12 = vector.load %arg1[%c0_3, %c0_4] : memref<40x32xf32, #tpu.memory_space<vmem>>, vector<40x32xf32>
    %c0_5 = arith.constant 0 : index
    %c0_6 = arith.constant 0 : index
    %13 = vector.load %arg8[%c0_5, %c0_6] : memref<32x32xf32, #tpu.memory_space<vmem>>, vector<32x32xf32>
    %cst = arith.constant dense<0.000000e+00> : vector<40x32xf32>
    %14 = tpu.matmul %12, %13, %cst {dimension_numbers = #tpu.dot_dimension_numbers<[1], [0], [0], [1], [0, 0, 1, 1], [], []>} : vector<40x32xf32>, vector<32x32xf32>, vector<40x32xf32> -> vector<40x32xf32>
    %c0_7 = arith.constant 0 : index
    %c0_8 = arith.constant 0 : index
    %15 = vector.load %arg0[%c0_7, %c0_8] : memref<32x32xf32, #tpu.memory_space<vmem>>, vector<32x32xf32>
    %cst_9 = arith.constant dense<0.000000e+00> : vector<64x32xf32>
    %16 = tpu.matmul %5, %15, %cst_9 {dimension_numbers = #tpu.dot_dimension_numbers<[1], [0], [0], [1], [0, 0, 1, 1], [], []>} : vector<64x32xf32>, vector<32x32xf32>, vector<64x32xf32> -> vector<64x32xf32>
    %cst_10 = arith.constant dense<0.000000e+00> : vector<64x32xf32>
    %17 = tpu.matmul %11, %14, %cst_10 {dimension_numbers = #tpu.dot_dimension_numbers<[1], [0], [0], [1], [0, 0, 1, 1], [], []>} : vector<64x40xf32>, vector<40x32xf32>, vector<64x32xf32> -> vector<64x32xf32>
    %18 = arith.addf %16, %17 : vector<64x32xf32>
    %c0_11 = arith.constant 0 : index
    %c0_12 = arith.constant 0 : index
    %19 = vector.load %arg2[%c0_11, %c0_12] : memref<64x16xf32, #tpu.memory_space<vmem>>, vector<64x16xf32>
    %c0_13 = arith.constant 0 : index
    %c0_14 = arith.constant 0 : index
    %20 = vector.load %arg9[%c0_13, %c0_14] : memref<16x32xf32, #tpu.memory_space<vmem>>, vector<16x32xf32>
    %cst_15 = arith.constant dense<0.000000e+00> : vector<64x32xf32>
    %21 = tpu.matmul %19, %20, %cst_15 {dimension_numbers = #tpu.dot_dimension_numbers<[1], [0], [0], [1], [0, 0, 1, 1], [], []>} : vector<64x16xf32>, vector<16x32xf32>, vector<64x32xf32> -> vector<64x32xf32>
    %22 = arith.addf %18, %21 : vector<64x32xf32>
    %c0_16 = arith.constant 0 : index
    %c0_17 = arith.constant 0 : index
    %23 = vector.load %arg10[%c0_16, %c0_17] : memref<1x32xf32, #tpu.memory_space<vmem>>, vector<1x32xf32>
    %24 = vector.broadcast %23 : vector<1x32xf32> to vector<64x32xf32>
    %25 = arith.addf %22, %24 : vector<64x32xf32>
    %cst_18 = arith.constant dense<0.000000e+00> : vector<64xf32>
    %26 = vector.multi_reduction <add>, %25, %cst_18 [1] : vector<64x32xf32> to vector<64xf32>
    %27 = vector.shape_cast %26 : vector<64xf32> to vector<64x1xf32>
    %cst_19 = arith.constant 3.200000e+01 : f32
    %28 = vector.broadcast %cst_19 : f32 to vector<64x1xf32>
    %29 = arith.divf %27, %28 : vector<64x1xf32>
    %30 = vector.broadcast %29 : vector<64x1xf32> to vector<64x32xf32>
    %31 = arith.subf %25, %30 : vector<64x32xf32>
    %32 = arith.mulf %31, %31 : vector<64x32xf32>
    %cst_20 = arith.constant dense<0.000000e+00> : vector<64xf32>
    %33 = vector.multi_reduction <add>, %32, %cst_20 [1] : vector<64x32xf32> to vector<64xf32>
    %34 = vector.shape_cast %33 : vector<64xf32> to vector<64x1xf32>
    %cst_21 = arith.constant 3.200000e+01 : f32
    %35 = vector.broadcast %cst_21 : f32 to vector<64x1xf32>
    %36 = arith.divf %34, %35 : vector<64x1xf32>
    %37 = vector.broadcast %29 : vector<64x1xf32> to vector<64x32xf32>
    %38 = arith.subf %25, %37 : vector<64x32xf32>
    %cst_22 = arith.constant 9.99999974E-6 : f32
    %39 = vector.broadcast %cst_22 : f32 to vector<64x1xf32>
    %40 = arith.addf %36, %39 : vector<64x1xf32>
    %41 = math.rsqrt %40 : vector<64x1xf32>
    %42 = vector.broadcast %41 : vector<64x1xf32> to vector<64x32xf32>
    %43 = arith.mulf %38, %42 : vector<64x32xf32>
    %c0_23 = arith.constant 0 : index
    %c0_24 = arith.constant 0 : index
    %44 = vector.load %arg11[%c0_23, %c0_24] : memref<1x32xf32, #tpu.memory_space<vmem>>, vector<1x32xf32>
    %45 = vector.broadcast %44 : vector<1x32xf32> to vector<64x32xf32>
    %46 = arith.mulf %43, %45 : vector<64x32xf32>
    %c0_25 = arith.constant 0 : index
    %c0_26 = arith.constant 0 : index
    %47 = vector.load %arg12[%c0_25, %c0_26] : memref<1x32xf32, #tpu.memory_space<vmem>>, vector<1x32xf32>
    %48 = vector.broadcast %47 : vector<1x32xf32> to vector<64x32xf32>
    %49 = arith.addf %46, %48 : vector<64x32xf32>
    %cst_27 = arith.constant 0.000000e+00 : f32
    %50 = vector.broadcast %cst_27 : f32 to vector<8x16x32xf32>
    %c0_28 = arith.constant 0 : index
    %c0_29 = arith.constant 0 : index
    %c0_30 = arith.constant 0 : index
    %51 = vector.load %arg29[%c0_28, %c0_29, %c0_30] : memref<8x16x32xf32, #tpu.memory_space<vmem>>, vector<8x16x32xf32>
    tpu.vector_store %arg29[%c0_28, %c0_29, %c0_30], %50 {strides = array<i32>} : memref<8x16x32xf32, #tpu.memory_space<vmem>>, vector<8x16x32xf32>,
    %52 = vector.shape_cast %49 : vector<64x32xf32> to vector<8x8x32xf32>
    %c0_31 = arith.constant 0 : index
    %c4 = arith.constant 4 : index
    %c0_32 = arith.constant 0 : index
    %53 = vector.load %arg29[%c0_31, %c4, %c0_32] : memref<8x16x32xf32, #tpu.memory_space<vmem>>, vector<8x8x32xf32>
    tpu.vector_store %arg29[%c0_31, %c4, %c0_32], %52 {strides = array<i32>} : memref<8x16x32xf32, #tpu.memory_space<vmem>>, vector<8x8x32xf32>,
    %c0_33 = arith.constant 0 : index
    %c0_34 = arith.constant 0 : index
    %54 = vector.load %arg13[%c0_33, %c0_34] : memref<9x32xf32, #tpu.memory_space<vmem>>, vector<9x32xf32>
    %cst_35 = arith.constant 0.000000e+00 : f32
    %55 = vector.broadcast %cst_35 : f32 to vector<8x8x32xf32>
    %c0_36 = arith.constant 0 : index
    %c0_37 = arith.constant 0 : index
    %c0_38 = arith.constant 0 : index
    %56 = vector.load %arg29[%c0_36, %c0_37, %c0_38] : memref<8x16x32xf32, #tpu.memory_space<vmem>>, vector<8x8x32xf32>
    %57 = vector.extract_strided_slice %54 {offsets = [0, 0], sizes = [1, 32], strides = [1, 1]} : vector<9x32xf32> to vector<1x32xf32>
    %58 = vector.shape_cast %57 : vector<1x32xf32> to vector<32xf32>
    %59 = vector.shape_cast %58 : vector<32xf32> to vector<1x1x32xf32>
    %60 = vector.broadcast %59 : vector<1x1x32xf32> to vector<8x8x32xf32>
    %61 = arith.mulf %56, %60 : vector<8x8x32xf32>
    %62 = arith.addf %55, %61 : vector<8x8x32xf32>
    %c0_39 = arith.constant 0 : index
    %c1 = arith.constant 1 : index
    %c0_40 = arith.constant 0 : index
    %63 = vector.load %arg29[%c0_39, %c1, %c0_40] : memref<8x16x32xf32, #tpu.memory_space<vmem>>, vector<8x8x32xf32>
    %64 = vector.extract_strided_slice %54 {offsets = [1, 0], sizes = [1, 32], strides = [1, 1]} : vector<9x32xf32> to vector<1x32xf32>
    %65 = vector.shape_cast %64 : vector<1x32xf32> to vector<32xf32>
    %66 = vector.shape_cast %65 : vector<32xf32> to vector<1x1x32xf32>
    %67 = vector.broadcast %66 : vector<1x1x32xf32> to vector<8x8x32xf32>
    %68 = arith.mulf %63, %67 : vector<8x8x32xf32>
    %69 = arith.addf %62, %68 : vector<8x8x32xf32>
    %c0_41 = arith.constant 0 : index
    %c2 = arith.constant 2 : index
    %c0_42 = arith.constant 0 : index
    %70 = vector.load %arg29[%c0_41, %c2, %c0_42] : memref<8x16x32xf32, #tpu.memory_space<vmem>>, vector<8x8x32xf32>
    %71 = vector.extract_strided_slice %54 {offsets = [2, 0], sizes = [1, 32], strides = [1, 1]} : vector<9x32xf32> to vector<1x32xf32>
    %72 = vector.shape_cast %71 : vector<1x32xf32> to vector<32xf32>
    %73 = vector.shape_cast %72 : vector<32xf32> to vector<1x1x32xf32>
    %74 = vector.broadcast %73 : vector<1x1x32xf32> to vector<8x8x32xf32>
    %75 = arith.mulf %70, %74 : vector<8x8x32xf32>
    %76 = arith.addf %69, %75 : vector<8x8x32xf32>
    %c0_43 = arith.constant 0 : index
    %c3 = arith.constant 3 : index
    %c0_44 = arith.constant 0 : index
    %77 = vector.load %arg29[%c0_43, %c3, %c0_44] : memref<8x16x32xf32, #tpu.memory_space<vmem>>, vector<8x8x32xf32>
    %78 = vector.extract_strided_slice %54 {offsets = [3, 0], sizes = [1, 32], strides = [1, 1]} : vector<9x32xf32> to vector<1x32xf32>
    %79 = vector.shape_cast %78 : vector<1x32xf32> to vector<32xf32>
    %80 = vector.shape_cast %79 : vector<32xf32> to vector<1x1x32xf32>
    %81 = vector.broadcast %80 : vector<1x1x32xf32> to vector<8x8x32xf32>
    %82 = arith.mulf %77, %81 : vector<8x8x32xf32>
    %83 = arith.addf %76, %82 : vector<8x8x32xf32>
    %c0_45 = arith.constant 0 : index
    %c4_46 = arith.constant 4 : index
    %c0_47 = arith.constant 0 : index
    %84 = vector.load %arg29[%c0_45, %c4_46, %c0_47] : memref<8x16x32xf32, #tpu.memory_space<vmem>>, vector<8x8x32xf32>
    %85 = vector.extract_strided_slice %54 {offsets = [4, 0], sizes = [1, 32], strides = [1, 1]} : vector<9x32xf32> to vector<1x32xf32>
    %86 = vector.shape_cast %85 : vector<1x32xf32> to vector<32xf32>
    %87 = vector.shape_cast %86 : vector<32xf32> to vector<1x1x32xf32>
    %88 = vector.broadcast %87 : vector<1x1x32xf32> to vector<8x8x32xf32>
    %89 = arith.mulf %84, %88 : vector<8x8x32xf32>
    %90 = arith.addf %83, %89 : vector<8x8x32xf32>
    %c0_48 = arith.constant 0 : index
    %c5 = arith.constant 5 : index
    %c0_49 = arith.constant 0 : index
    %91 = vector.load %arg29[%c0_48, %c5, %c0_49] : memref<8x16x32xf32, #tpu.memory_space<vmem>>, vector<8x8x32xf32>
    %92 = vector.extract_strided_slice %54 {offsets = [5, 0], sizes = [1, 32], strides = [1, 1]} : vector<9x32xf32> to vector<1x32xf32>
    %93 = vector.shape_cast %92 : vector<1x32xf32> to vector<32xf32>
    %94 = vector.shape_cast %93 : vector<32xf32> to vector<1x1x32xf32>
    %95 = vector.broadcast %94 : vector<1x1x32xf32> to vector<8x8x32xf32>
    %96 = arith.mulf %91, %95 : vector<8x8x32xf32>
    %97 = arith.addf %90, %96 : vector<8x8x32xf32>
    %c0_50 = arith.constant 0 : index
    %c6 = arith.constant 6 : index
    %c0_51 = arith.constant 0 : index
    %98 = vector.load %arg29[%c0_50, %c6, %c0_51] : memref<8x16x32xf32, #tpu.memory_space<vmem>>, vector<8x8x32xf32>
    %99 = vector.extract_strided_slice %54 {offsets = [6, 0], sizes = [1, 32], strides = [1, 1]} : vector<9x32xf32> to vector<1x32xf32>
    %100 = vector.shape_cast %99 : vector<1x32xf32> to vector<32xf32>
    %101 = vector.shape_cast %100 : vector<32xf32> to vector<1x1x32xf32>
    %102 = vector.broadcast %101 : vector<1x1x32xf32> to vector<8x8x32xf32>
    %103 = arith.mulf %98, %102 : vector<8x8x32xf32>
    %104 = arith.addf %97, %103 : vector<8x8x32xf32>
    %c0_52 = arith.constant 0 : index
    %c7 = arith.constant 7 : index
    %c0_53 = arith.constant 0 : index
    %105 = vector.load %arg29[%c0_52, %c7, %c0_53] : memref<8x16x32xf32, #tpu.memory_space<vmem>>, vector<8x8x32xf32>
    %106 = vector.extract_strided_slice %54 {offsets = [7, 0], sizes = [1, 32], strides = [1, 1]} : vector<9x32xf32> to vector<1x32xf32>
    %107 = vector.shape_cast %106 : vector<1x32xf32> to vector<32xf32>
    %108 = vector.shape_cast %107 : vector<32xf32> to vector<1x1x32xf32>
    %109 = vector.broadcast %108 : vector<1x1x32xf32> to vector<8x8x32xf32>
    %110 = arith.mulf %105, %109 : vector<8x8x32xf32>
    %111 = arith.addf %104, %110 : vector<8x8x32xf32>
    %c0_54 = arith.constant 0 : index
    %c8 = arith.constant 8 : index
    %c0_55 = arith.constant 0 : index
    %112 = vector.load %arg29[%c0_54, %c8, %c0_55] : memref<8x16x32xf32, #tpu.memory_space<vmem>>, vector<8x8x32xf32>
    %113 = vector.extract_strided_slice %54 {offsets = [8, 0], sizes = [1, 32], strides = [1, 1]} : vector<9x32xf32> to vector<1x32xf32>
    %114 = vector.shape_cast %113 : vector<1x32xf32> to vector<32xf32>
    %115 = vector.shape_cast %114 : vector<32xf32> to vector<1x1x32xf32>
    %116 = vector.broadcast %115 : vector<1x1x32xf32> to vector<8x8x32xf32>
    %117 = arith.mulf %112, %116 : vector<8x8x32xf32>
    %118 = arith.addf %111, %117 : vector<8x8x32xf32>
    %c0_56 = arith.constant 0 : index
    %c0_57 = arith.constant 0 : index
    %119 = vector.load %arg14[%c0_56, %c0_57] : memref<1x32xf32, #tpu.memory_space<vmem>>, vector<1x32xf32>
    %120 = vector.shape_cast %119 : vector<1x32xf32> to vector<1x1x32xf32>
    %121 = vector.broadcast %120 : vector<1x1x32xf32> to vector<8x8x32xf32>
    %122 = arith.addf %118, %121 : vector<8x8x32xf32>
    %cst_58 = arith.constant 0.000000e+00 : f32
    %123 = vector.broadcast %cst_58 : f32 to vector<8x8x32xf32>
    %124 = arith.maximumf %122, %123 : vector<8x8x32xf32>
    %125 = vector.shape_cast %124 : vector<8x8x32xf32> to vector<64x32xf32>
    %c0_59 = arith.constant 0 : index
    %c0_60 = arith.constant 0 : index
    %126 = vector.load %arg15[%c0_59, %c0_60] : memref<32x32xf32, #tpu.memory_space<vmem>>, vector<32x32xf32>
    %cst_61 = arith.constant dense<0.000000e+00> : vector<64x32xf32>
    %127 = tpu.matmul %125, %126, %cst_61 {dimension_numbers = #tpu.dot_dimension_numbers<[1], [0], [0], [1], [0, 0, 1, 1], [], []>} : vector<64x32xf32>, vector<32x32xf32>, vector<64x32xf32> -> vector<64x32xf32>
    %c0_62 = arith.constant 0 : index
    %c0_63 = arith.constant 0 : index
    %128 = vector.load %arg16[%c0_62, %c0_63] : memref<1x32xf32, #tpu.memory_space<vmem>>, vector<1x32xf32>
    %129 = vector.broadcast %128 : vector<1x32xf32> to vector<64x32xf32>
    %130 = arith.addf %127, %129 : vector<64x32xf32>
    %cst_64 = arith.constant 0.000000e+00 : f32
    %131 = vector.broadcast %cst_64 : f32 to vector<64x32xf32>
    %132 = arith.maximumf %130, %131 : vector<64x32xf32>
    %133 = tpu.iota {dimensions = array<i32: 0>} : vector<32x64xi32>
    %c0_65 = arith.constant 0 : index
    %c0_66 = arith.constant 0 : index
    %134 = vector.load %arg4[%c0_65, %c0_66] : memref<1x64xi32, #tpu.memory_space<vmem>>, vector<1x64xi32>
    %135 = vector.broadcast %134 : vector<1x64xi32> to vector<32x64xi32>
    %136 = arith.cmpi eq, %133, %135 : vector<32x64xi32>
    %137 = arith.extui %136 : vector<32x64xi1> to vector<32x64xi32>
    %138 = arith.sitofp %137 : vector<32x64xi32> to vector<32x64xf32>
    %cst_67 = arith.constant dense<0.000000e+00> : vector<32x32xf32>
    %139 = tpu.matmul %138, %132, %cst_67 {dimension_numbers = #tpu.dot_dimension_numbers<[1], [0], [0], [1], [0, 0, 1, 1], [], []>} : vector<32x64xf32>, vector<64x32xf32>, vector<32x32xf32> -> vector<32x32xf32>
    %cst_68 = arith.constant dense<0.000000e+00> : vector<32xf32>
    %140 = vector.multi_reduction <add>, %138, %cst_68 [1] : vector<32x64xf32> to vector<32xf32>
    %141 = vector.shape_cast %140 : vector<32xf32> to vector<32x1xf32>
    %cst_69 = arith.constant 1.000000e+00 : f32
    %142 = vector.broadcast %cst_69 : f32 to vector<32x1xf32>
    %143 = arith.maximumf %141, %142 : vector<32x1xf32>
    %144 = tpu.reciprocal %143 {approx = true} : vector<32x1xf32> -> vector<32x1xf32>
    %145 = arith.mulf %143, %144 : vector<32x1xf32>
    %cst_70 = arith.constant 2.000000e+00 : f32
    %146 = vector.broadcast %cst_70 : f32 to vector<32x1xf32>
    %147 = arith.subf %146, %145 : vector<32x1xf32>
    %148 = arith.mulf %144, %147 : vector<32x1xf32>
    %149 = vector.broadcast %148 : vector<32x1xf32> to vector<32x32xf32>
    %150 = arith.mulf %139, %149 : vector<32x32xf32>
    %151 = tpu.iota {dimensions = array<i32: 0>} : vector<40x64xi32>
    %c0_71 = arith.constant 0 : index
    %c0_72 = arith.constant 0 : index
    %152 = vector.load %arg6[%c0_71, %c0_72] : memref<1x64xi32, #tpu.memory_space<vmem>>, vector<1x64xi32>
    %153 = vector.broadcast %152 : vector<1x64xi32> to vector<40x64xi32>
    %154 = arith.cmpi eq, %151, %153 : vector<40x64xi32>
    %155 = arith.extui %154 : vector<40x64xi1> to vector<40x64xi32>
    %156 = arith.sitofp %155 : vector<40x64xi32> to vector<40x64xf32>
    %c0_73 = arith.constant 0 : index
    %c0_74 = arith.constant 0 : index
    %157 = vector.load %arg7[%c0_73, %c0_74] : memref<1x64xf32, #tpu.memory_space<vmem>>, vector<1x64xf32>
    %158 = vector.broadcast %157 : vector<1x64xf32> to vector<40x64xf32>
    %159 = arith.mulf %156, %158 : vector<40x64xf32>
    %cst_75 = arith.constant dense<0.000000e+00> : vector<40x32xf32>
    %160 = tpu.matmul %159, %132, %cst_75 {dimension_numbers = #tpu.dot_dimension_numbers<[1], [0], [0], [1], [0, 0, 1, 1], [], []>} : vector<40x64xf32>, vector<64x32xf32>, vector<40x32xf32> -> vector<40x32xf32>
    %cst_76 = arith.constant dense<0.000000e+00> : vector<40xf32>
    %161 = vector.multi_reduction <add>, %159, %cst_76 [1] : vector<40x64xf32> to vector<40xf32>
    %162 = vector.shape_cast %161 : vector<40xf32> to vector<40x1xf32>
    %cst_77 = arith.constant 1.000000e+00 : f32
    %163 = vector.broadcast %cst_77 : f32 to vector<40x1xf32>
    %164 = arith.maximumf %162, %163 : vector<40x1xf32>
    %165 = tpu.reciprocal %164 {approx = true} : vector<40x1xf32> -> vector<40x1xf32>
    %166 = arith.mulf %164, %165 : vector<40x1xf32>
    %cst_78 = arith.constant 2.000000e+00 : f32
    %167 = vector.broadcast %cst_78 : f32 to vector<40x1xf32>
    %168 = arith.subf %167, %166 : vector<40x1xf32>
    %169 = arith.mulf %165, %168 : vector<40x1xf32>
    %170 = vector.broadcast %169 : vector<40x1xf32> to vector<40x32xf32>
    %171 = arith.mulf %160, %170 : vector<40x32xf32>
    %c0_79 = arith.constant 0 : index
    %c0_80 = arith.constant 0 : index
    %172 = vector.load %arg17[%c0_79, %c0_80] : memref<32x32xf32, #tpu.memory_space<vmem>>, vector<32x32xf32>
    %cst_81 = arith.constant dense<0.000000e+00> : vector<32x32xf32>
    %173 = tpu.matmul %150, %172, %cst_81 {dimension_numbers = #tpu.dot_dimension_numbers<[1], [0], [0], [1], [0, 0, 1, 1], [], []>} : vector<32x32xf32>, vector<32x32xf32>, vector<32x32xf32> -> vector<32x32xf32>
    %c0_82 = arith.constant 0 : index
    %c0_83 = arith.constant 0 : index
    %174 = vector.load %arg18[%c0_82, %c0_83] : memref<1x32xf32, #tpu.memory_space<vmem>>, vector<1x32xf32>
    %175 = vector.broadcast %174 : vector<1x32xf32> to vector<32x32xf32>
    %176 = arith.addf %173, %175 : vector<32x32xf32>
    %cst_84 = arith.constant 0.000000e+00 : f32
    %177 = vector.broadcast %cst_84 : f32 to vector<32x32xf32>
    %178 = arith.maximumf %176, %177 : vector<32x32xf32>
    %c0_85 = arith.constant 0 : index
    %c0_86 = arith.constant 0 : index
    %179 = vector.load %arg0[%c0_85, %c0_86] : memref<32x32xf32, #tpu.memory_space<vmem>>, vector<32x32xf32>
    %c0_87 = arith.constant 0 : index
    %c0_88 = arith.constant 0 : index
    %180 = vector.load %arg19[%c0_87, %c0_88] : memref<32x32xf32, #tpu.memory_space<vmem>>, vector<32x32xf32>
    %cst_89 = arith.constant dense<0.000000e+00> : vector<32x32xf32>
    %181 = tpu.matmul %178, %180, %cst_89 {dimension_numbers = #tpu.dot_dimension_numbers<[1], [0], [0], [1], [0, 0, 1, 1], [], []>} : vector<32x32xf32>, vector<32x32xf32>, vector<32x32xf32> -> vector<32x32xf32>
    %182 = arith.addf %179, %181 : vector<32x32xf32>
    %c0_90 = arith.constant 0 : index
    %c0_91 = arith.constant 0 : index
    %183 = vector.load %arg20[%c0_90, %c0_91] : memref<1x32xf32, #tpu.memory_space<vmem>>, vector<1x32xf32>
    %184 = vector.broadcast %183 : vector<1x32xf32> to vector<32x32xf32>
    %185 = arith.addf %182, %184 : vector<32x32xf32>
    %c0_92 = arith.constant 0 : index
    %c0_93 = arith.constant 0 : index
    %186 = vector.load %arg27[%c0_92, %c0_93] : memref<32x32xf32, #tpu.memory_space<vmem>>, vector<32x32xf32>
    tpu.vector_store %arg27[%c0_92, %c0_93], %185 {strides = array<i32>} : memref<32x32xf32, #tpu.memory_space<vmem>>, vector<32x32xf32>,
    %c0_94 = arith.constant 0 : index
    %c0_95 = arith.constant 0 : index
    %187 = vector.load %arg21[%c0_94, %c0_95] : memref<32x32xf32, #tpu.memory_space<vmem>>, vector<32x32xf32>
    %cst_96 = arith.constant dense<0.000000e+00> : vector<40x32xf32>
    %188 = tpu.matmul %171, %187, %cst_96 {dimension_numbers = #tpu.dot_dimension_numbers<[1], [0], [0], [1], [0, 0, 1, 1], [], []>} : vector<40x32xf32>, vector<32x32xf32>, vector<40x32xf32> -> vector<40x32xf32>
    %c0_97 = arith.constant 0 : index
    %c0_98 = arith.constant 0 : index
    %189 = vector.load %arg22[%c0_97, %c0_98] : memref<1x32xf32, #tpu.memory_space<vmem>>, vector<1x32xf32>
    %190 = vector.broadcast %189 : vector<1x32xf32> to vector<40x32xf32>
    %191 = arith.addf %188, %190 : vector<40x32xf32>
    %cst_99 = arith.constant 0.000000e+00 : f32
    %192 = vector.broadcast %cst_99 : f32 to vector<40x32xf32>
    %193 = arith.maximumf %191, %192 : vector<40x32xf32>
    %c0_100 = arith.constant 0 : index
    %c0_101 = arith.constant 0 : index
    %194 = vector.load %arg1[%c0_100, %c0_101] : memref<40x32xf32, #tpu.memory_space<vmem>>, vector<40x32xf32>
    %c0_102 = arith.constant 0 : index
    %c0_103 = arith.constant 0 : index
    %195 = vector.load %arg23[%c0_102, %c0_103] : memref<32x32xf32, #tpu.memory_space<vmem>>, vector<32x32xf32>
    %cst_104 = arith.constant dense<0.000000e+00> : vector<40x32xf32>
    %196 = tpu.matmul %193, %195, %cst_104 {dimension_numbers = #tpu.dot_dimension_numbers<[1], [0], [0], [1], [0, 0, 1, 1], [], []>} : vector<40x32xf32>, vector<32x32xf32>, vector<40x32xf32> -> vector<40x32xf32>
    %197 = arith.addf %194, %196 : vector<40x32xf32>
    %c0_105 = arith.constant 0 : index
    %c0_106 = arith.constant 0 : index
    %198 = vector.load %arg24[%c0_105, %c0_106] : memref<1x32xf32, #tpu.memory_space<vmem>>, vector<1x32xf32>
    %199 = vector.broadcast %198 : vector<1x32xf32> to vector<40x32xf32>
    %200 = arith.addf %197, %199 : vector<40x32xf32>
    %cst_107 = arith.constant dense<0.000000e+00> : vector<40xf32>
    %201 = vector.multi_reduction <add>, %200, %cst_107 [1] : vector<40x32xf32> to vector<40xf32>
    %202 = vector.shape_cast %201 : vector<40xf32> to vector<40x1xf32>
    %cst_108 = arith.constant 3.200000e+01 : f32
    %203 = vector.broadcast %cst_108 : f32 to vector<40x1xf32>
    %204 = arith.divf %202, %203 : vector<40x1xf32>
    %205 = vector.broadcast %204 : vector<40x1xf32> to vector<40x32xf32>
    %206 = arith.subf %200, %205 : vector<40x32xf32>
    %207 = arith.mulf %206, %206 : vector<40x32xf32>
    %cst_109 = arith.constant dense<0.000000e+00> : vector<40xf32>
    %208 = vector.multi_reduction <add>, %207, %cst_109 [1] : vector<40x32xf32> to vector<40xf32>
    %209 = vector.shape_cast %208 : vector<40xf32> to vector<40x1xf32>
    %cst_110 = arith.constant 3.200000e+01 : f32
    %210 = vector.broadcast %cst_110 : f32 to vector<40x1xf32>
    %211 = arith.divf %209, %210 : vector<40x1xf32>
    %212 = vector.broadcast %204 : vector<40x1xf32> to vector<40x32xf32>
    %213 = arith.subf %200, %212 : vector<40x32xf32>
    %cst_111 = arith.constant 9.99999974E-6 : f32
    %214 = vector.broadcast %cst_111 : f32 to vector<40x1xf32>
    %215 = arith.addf %211, %214 : vector<40x1xf32>
    %216 = math.rsqrt %215 : vector<40x1xf32>
    %217 = vector.broadcast %216 : vector<40x1xf32> to vector<40x32xf32>
    %218 = arith.mulf %213, %217 : vector<40x32xf32>
    %c0_112 = arith.constant 0 : index
    %c0_113 = arith.constant 0 : index
    %219 = vector.load %arg25[%c0_112, %c0_113] : memref<1x32xf32, #tpu.memory_space<vmem>>, vector<1x32xf32>
    %220 = vector.broadcast %219 : vector<1x32xf32> to vector<40x32xf32>
    %221 = arith.mulf %218, %220 : vector<40x32xf32>
    %c0_114 = arith.constant 0 : index
    %c0_115 = arith.constant 0 : index
    %222 = vector.load %arg26[%c0_114, %c0_115] : memref<1x32xf32, #tpu.memory_space<vmem>>, vector<1x32xf32>
    %223 = vector.broadcast %222 : vector<1x32xf32> to vector<40x32xf32>
    %224 = arith.addf %221, %223 : vector<40x32xf32>
    %c0_116 = arith.constant 0 : index
    %c0_117 = arith.constant 0 : index
    %225 = vector.load %arg28[%c0_116, %c0_117] : memref<40x32xf32, #tpu.memory_space<vmem>>, vector<40x32xf32>
    tpu.vector_store %arg28[%c0_116, %c0_117], %224 {strides = array<i32>} : memref<40x32xf32, #tpu.memory_space<vmem>>, vector<40x32xf32>,
    return
  }
}

</mosaic_0001>

<llo_original>
// kernel: walk_encoder_forward.1
$region0: #{walk_encoder_forward.1}
  #allocation0 [shape = 'u32[]', space=smem, size = 0x4, offset = 0x4, fixed_abs, tag = 'smem constant byte address 0x4 - core index']
  #allocation1 [shape = 'u32[144,128]{1,0:T(1,128)}', space=vmem, size = 0x12000, scoped, tag = 'internal scratch']
  #allocation2 [shape = 'f32[8,16,32]{2,1,0:T(8,128)}', space=vmem, size = 0x10000, scoped, tag = 'scratch operand']
  %s0 = inlined_call_operand.vmem [shape: f32[32,32], index: 0, kind: input, shape index: {}]
  %s1 = inlined_call_operand.vmem [shape: f32[40,32], index: 1, kind: input, shape index: {}]
  %s2 = inlined_call_operand.vmem [shape: f32[64,16], index: 2, kind: input, shape index: {}]
  %s3 = inlined_call_operand.vmem [shape: s32[64,1], index: 3, kind: input, shape index: {}]
  %s4 = inlined_call_operand.vmem [shape: s32[1,64], index: 4, kind: input, shape index: {}]
  %s5 = inlined_call_operand.vmem [shape: s32[64,1], index: 5, kind: input, shape index: {}]
  %s6 = inlined_call_operand.vmem [shape: s32[1,64], index: 6, kind: input, shape index: {}]
  %s7 = inlined_call_operand.vmem [shape: f32[1,64], index: 7, kind: input, shape index: {}]
  %s8 = inlined_call_operand.vmem [shape: f32[32,32], index: 8, kind: input, shape index: {}]
  %s9 = inlined_call_operand.vmem [shape: f32[16,32], index: 9, kind: input, shape index: {}]
  %s10 = inlined_call_operand.vmem [shape: f32[1,32], index: 10, kind: input, shape index: {}]
  %s11 = inlined_call_operand.vmem [shape: f32[1,32], index: 11, kind: input, shape index: {}]
  %s12 = inlined_call_operand.vmem [shape: f32[1,32], index: 12, kind: input, shape index: {}]
  %s13 = inlined_call_operand.vmem [shape: f32[9,32], index: 13, kind: input, shape index: {}]
  %s14 = inlined_call_operand.vmem [shape: f32[1,32], index: 14, kind: input, shape index: {}]
  %s15 = inlined_call_operand.vmem [shape: f32[32,32], index: 15, kind: input, shape index: {}]
  %s16 = inlined_call_operand.vmem [shape: f32[1,32], index: 16, kind: input, shape index: {}]
  %s17 = inlined_call_operand.vmem [shape: f32[32,32], index: 17, kind: input, shape index: {}]
  %s18 = inlined_call_operand.vmem [shape: f32[1,32], index: 18, kind: input, shape index: {}]
  %s19 = inlined_call_operand.vmem [shape: f32[32,32], index: 19, kind: input, shape index: {}]
  %s20 = inlined_call_operand.vmem [shape: f32[1,32], index: 20, kind: input, shape index: {}]
  %s21 = inlined_call_operand.vmem [shape: f32[32,32], index: 21, kind: input, shape index: {}]
  %s22 = inlined_call_operand.vmem [shape: f32[1,32], index: 22, kind: input, shape index: {}]
  %s23 = inlined_call_operand.vmem [shape: f32[32,32], index: 23, kind: input, shape index: {}]
  %s24 = inlined_call_operand.vmem [shape: f32[1,32], index: 24, kind: input, shape index: {}]
  %s25 = inlined_call_operand.vmem [shape: f32[1,32], index: 25, kind: input, shape index: {}]
  %s26 = inlined_call_operand.vmem [shape: f32[1,32], index: 26, kind: input, shape index: {}]
  %s27 = inlined_call_operand.hbm [shape: f32[32,32], index: 27, kind: output, shape index: {0}]
  %s28 = inlined_call_operand.vmem [shape: f32[40,32], index: 28, kind: output, shape index: {1}]
  %29 = xla_tuple %s27, %s28
  %s30 = sld [smem:[#allocation0]]
  $region126: #{walk_encoder_forward.1} parent=0
    _
  %s32 = ssub.s32 1, %s30
  %s33 = scalar_select 0, %s32, %s30
  $region1: #{walk_encoder_forward.1} parent=0
    #allocation3 [shape = 'u8[16384]{0}', space=vmem, size = 0x4000, scoped, tag = 'output window, operand 0, single buffered']
    #allocation4 [shape = 's32[1]{0}', space=sflag, size = 0x4, scoped, tag = 'scoped memory for walk_encoder_forward.1']
    %34 = vsyncpa [#allocation4], 0
    // Predicated region
    $region2: #{walk_encoder_forward.1} parent=1 // pred_check
      _
    $region3: #{walk_encoder_forward.1} parent=1 // pred_check_branch
      %36 = sbr.rel (0) target = $region5
    $region4: #{walk_encoder_forward.1} parent=1 // pred_region
      _
    $region5: #{walk_encoder_forward.1} parent=1 // pred_fallthru
      _
    // Predicated region
    $region6: #{walk_encoder_forward.1} parent=1 // pred_check
      _
    $region7: #{walk_encoder_forward.1} parent=1 // pred_check_branch
      %38 = sbr.rel (0) target = $region9
    $region8: #{walk_encoder_forward.1} parent=1 // pred_region
      _
    $region9: #{walk_encoder_forward.1} parent=1 // pred_fallthru
      _
    // Predicated region
    $region10: #{walk_encoder_forward.1} parent=1 // pred_check
      _
    $region11: #{walk_encoder_forward.1} parent=1 // pred_check_branch
      %40 = sbr.rel (0) target = $region13
    $region12: #{walk_encoder_forward.1} parent=1 // pred_region
      _
    $region13: #{walk_encoder_forward.1} parent=1 // pred_fallthru
      _
    // Predicated region
    $region14: #{walk_encoder_forward.1} parent=1 // pred_check
      _
    $region15: #{walk_encoder_forward.1} parent=1 // pred_check_branch
      %42 = sbr.rel (0) target = $region17
    $region16: #{walk_encoder_forward.1} parent=1 // pred_region
      _
    $region17: #{walk_encoder_forward.1} parent=1 // pred_fallthru
      _
    // Predicated region
    $region18: #{walk_encoder_forward.1} parent=1 // pred_check
      _
    $region19: #{walk_encoder_forward.1} parent=1 // pred_check_branch
      %44 = sbr.rel (0) target = $region21
    $region20: #{walk_encoder_forward.1} parent=1 // pred_region
      _
    $region21: #{walk_encoder_forward.1} parent=1 // pred_fallthru
      _
    // Predicated region
    $region22: #{walk_encoder_forward.1} parent=1 // pred_check
      _
    $region23: #{walk_encoder_forward.1} parent=1 // pred_check_branch
      %46 = sbr.rel (0) target = $region25
    $region24: #{walk_encoder_forward.1} parent=1 // pred_region
      _
    $region25: #{walk_encoder_forward.1} parent=1 // pred_fallthru
      _
    // Predicated region
    $region26: #{walk_encoder_forward.1} parent=1 // pred_check
      _
    $region27: #{walk_encoder_forward.1} parent=1 // pred_check_branch
      %48 = sbr.rel (0) target = $region29
    $region28: #{walk_encoder_forward.1} parent=1 // pred_region
      _
    $region29: #{walk_encoder_forward.1} parent=1 // pred_fallthru
      _
    // Predicated region
    $region30: #{walk_encoder_forward.1} parent=1 // pred_check
      _
    $region31: #{walk_encoder_forward.1} parent=1 // pred_check_branch
      %50 = sbr.rel (0) target = $region33
    $region32: #{walk_encoder_forward.1} parent=1 // pred_region
      _
    $region33: #{walk_encoder_forward.1} parent=1 // pred_fallthru
      _
    // Predicated region
    $region34: #{walk_encoder_forward.1} parent=1 // pred_check
      _
    $region35: #{walk_encoder_forward.1} parent=1 // pred_check_branch
      %52 = sbr.rel (0) target = $region37
    $region36: #{walk_encoder_forward.1} parent=1 // pred_region
      _
    $region37: #{walk_encoder_forward.1} parent=1 // pred_fallthru
      _
    // Predicated region
    $region38: #{walk_encoder_forward.1} parent=1 // pred_check
      _
    $region39: #{walk_encoder_forward.1} parent=1 // pred_check_branch
      %54 = sbr.rel (0) target = $region41
    $region40: #{walk_encoder_forward.1} parent=1 // pred_region
      _
    $region41: #{walk_encoder_forward.1} parent=1 // pred_fallthru
      _
    // Predicated region
    $region42: #{walk_encoder_forward.1} parent=1 // pred_check
      _
    $region43: #{walk_encoder_forward.1} parent=1 // pred_check_branch
      %56 = sbr.rel (0) target = $region45
    $region44: #{walk_encoder_forward.1} parent=1 // pred_region
      _
    $region45: #{walk_encoder_forward.1} parent=1 // pred_fallthru
      _
    // Predicated region
    $region46: #{walk_encoder_forward.1} parent=1 // pred_check
      _
    $region47: #{walk_encoder_forward.1} parent=1 // pred_check_branch
      %58 = sbr.rel (0) target = $region49
    $region48: #{walk_encoder_forward.1} parent=1 // pred_region
      _
    $region49: #{walk_encoder_forward.1} parent=1 // pred_fallthru
      _
    // Predicated region
    $region50: #{walk_encoder_forward.1} parent=1 // pred_check
      _
    $region51: #{walk_encoder_forward.1} parent=1 // pred_check_branch
      %60 = sbr.rel (0) target = $region53
    $region52: #{walk_encoder_forward.1} parent=1 // pred_region
      _
    $region53: #{walk_encoder_forward.1} parent=1 // pred_fallthru
      _
    // Predicated region
    $region54: #{walk_encoder_forward.1} parent=1 // pred_check
      _
    $region55: #{walk_encoder_forward.1} parent=1 // pred_check_branch
      %62 = sbr.rel (0) target = $region57
    $region56: #{walk_encoder_forward.1} parent=1 // pred_region
      _
    $region57: #{walk_encoder_forward.1} parent=1 // pred_fallthru
      _
    // Predicated region
    $region58: #{walk_encoder_forward.1} parent=1 // pred_check
      _
    $region59: #{walk_encoder_forward.1} parent=1 // pred_check_branch
      %64 = sbr.rel (0) target = $region61
    $region60: #{walk_encoder_forward.1} parent=1 // pred_region
      _
    $region61: #{walk_encoder_forward.1} parent=1 // pred_fallthru
      _
    // Predicated region
    $region62: #{walk_encoder_forward.1} parent=1 // pred_check
      _
    $region63: #{walk_encoder_forward.1} parent=1 // pred_check_branch
      %66 = sbr.rel (0) target = $region65
    $region64: #{walk_encoder_forward.1} parent=1 // pred_region
      _
    $region65: #{walk_encoder_forward.1} parent=1 // pred_fallthru
      _
    // Predicated region
    $region66: #{walk_encoder_forward.1} parent=1 // pred_check
      _
    $region67: #{walk_encoder_forward.1} parent=1 // pred_check_branch
      %68 = sbr.rel (0) target = $region69
    $region68: #{walk_encoder_forward.1} parent=1 // pred_region
      _
    $region69: #{walk_encoder_forward.1} parent=1 // pred_fallthru
      _
    // Predicated region
    $region70: #{walk_encoder_forward.1} parent=1 // pred_check
      _
    $region71: #{walk_encoder_forward.1} parent=1 // pred_check_branch
      %70 = sbr.rel (0) target = $region73
    $region72: #{walk_encoder_forward.1} parent=1 // pred_region
      _
    $region73: #{walk_encoder_forward.1} parent=1 // pred_fallthru
      _
    // Predicated region
    $region74: #{walk_encoder_forward.1} parent=1 // pred_check
      _
    $region75: #{walk_encoder_forward.1} parent=1 // pred_check_branch
      %72 = sbr.rel (0) target = $region77
    $region76: #{walk_encoder_forward.1} parent=1 // pred_region
      _
    $region77: #{walk_encoder_forward.1} parent=1 // pred_fallthru
      _
    // Predicated region
    $region78: #{walk_encoder_forward.1} parent=1 // pred_check
      _
    $region79: #{walk_encoder_forward.1} parent=1 // pred_check_branch
      %74 = sbr.rel (0) target = $region81
    $region80: #{walk_encoder_forward.1} parent=1 // pred_region
      _
    $region81: #{walk_encoder_forward.1} parent=1 // pred_fallthru
      _
    // Predicated region
    $region82: #{walk_encoder_forward.1} parent=1 // pred_check
      _
    $region83: #{walk_encoder_forward.1} parent=1 // pred_check_branch
      %76 = sbr.rel (0) target = $region85
    $region84: #{walk_encoder_forward.1} parent=1 // pred_region
      _
    $region85: #{walk_encoder_forward.1} parent=1 // pred_fallthru
      _
    // Predicated region
    $region86: #{walk_encoder_forward.1} parent=1 // pred_check
      _
    $region87: #{walk_encoder_forward.1} parent=1 // pred_check_branch
      %78 = sbr.rel (0) target = $region89
    $region88: #{walk_encoder_forward.1} parent=1 // pred_region
      _
    $region89: #{walk_encoder_forward.1} parent=1 // pred_fallthru
      _
    // Predicated region
    $region90: #{walk_encoder_forward.1} parent=1 // pred_check
      _
    $region91: #{walk_encoder_forward.1} parent=1 // pred_check_branch
      %80 = sbr.rel (0) target = $region93
    $region92: #{walk_encoder_forward.1} parent=1 // pred_region
      _
    $region93: #{walk_encoder_forward.1} parent=1 // pred_fallthru
      _
    // Predicated region
    $region94: #{walk_encoder_forward.1} parent=1 // pred_check
      _
    $region95: #{walk_encoder_forward.1} parent=1 // pred_check_branch
      %82 = sbr.rel (0) target = $region97
    $region96: #{walk_encoder_forward.1} parent=1 // pred_region
      _
    $region97: #{walk_encoder_forward.1} parent=1 // pred_fallthru
      _
    // Predicated region
    $region98: #{walk_encoder_forward.1} parent=1 // pred_check
      _
    $region99: #{walk_encoder_forward.1} parent=1 // pred_check_branch
      %84 = sbr.rel (0) target = $region101
    $region100: #{walk_encoder_forward.1} parent=1 // pred_region
      _
    $region101: #{walk_encoder_forward.1} parent=1 // pred_fallthru
      _
    // Predicated region
    $region102: #{walk_encoder_forward.1} parent=1 // pred_check
      _
    $region103: #{walk_encoder_forward.1} parent=1 // pred_check_branch
      %86 = sbr.rel (0) target = $region105
    $region104: #{walk_encoder_forward.1} parent=1 // pred_region
      _
    $region105: #{walk_encoder_forward.1} parent=1 // pred_fallthru
      _
    // Predicated region
    $region106: #{walk_encoder_forward.1} parent=1 // pred_check
      _
    $region107: #{walk_encoder_forward.1} parent=1 // pred_check_branch
      %88 = sbr.rel (0) target = $region109
    $region108: #{walk_encoder_forward.1} parent=1 // pred_region
      _
    $region109: #{walk_encoder_forward.1} parent=1 // pred_fallthru
      _
    %v89 = vld [vmem:[%s3] sm:$0xff]
    %v90 = vld [vmem:[%s3 + $0x8] sm:$0xff]
    %v91 = vld [vmem:[%s3 + $0x10] sm:$0xff]
    %v92 = vld [vmem:[%s3 + $0x18] sm:$0xff]
    %v93 = vld [vmem:[%s3 + $0x20] sm:$0xff]
    %v94 = vld [vmem:[%s3 + $0x28] sm:$0xff]
    %v95 = vld [vmem:[%s3 + $0x30] sm:$0xff]
    %v96 = vld [vmem:[%s3 + $0x38] sm:$0xff]
    %v97 = vlaneseq
    %v98 = vand.u32 %v97, 127
    %99 = vset.pattern.permute.xlu0 0
    %100 = vperm.xlu0 %99, %v89
    %v101 = vpop.permute.xlu0 %100
    %102 = vset.pattern.permute.xlu0 0
    %103 = vperm.xlu0 %102, %v90
    %v104 = vpop.permute.xlu0 %103
    %105 = vset.pattern.permute.xlu0 0
    %106 = vperm.xlu0 %105, %v91
    %v107 = vpop.permute.xlu0 %106
    %108 = vset.pattern.permute.xlu0 0
    %109 = vperm.xlu0 %108, %v92
    %v110 = vpop.permute.xlu0 %109
    %111 = vset.pattern.permute.xlu0 0
    %112 = vperm.xlu0 %111, %v93
    %v113 = vpop.permute.xlu0 %112
    %114 = vset.pattern.permute.xlu0 0
    %115 = vperm.xlu0 %114, %v94
    %v116 = vpop.permute.xlu0 %115
    %117 = vset.pattern.permute.xlu0 0
    %118 = vperm.xlu0 %117, %v95
    %v119 = vpop.permute.xlu0 %118
    %120 = vset.pattern.permute.xlu0 0
    %121 = vperm.xlu0 %120, %v96
    %v122 = vpop.permute.xlu0 %121
    %vm123 = vcmp.eq.s32.totalorder %v101, %v98
    %vm124 = vcmp.eq.s32.totalorder %v104, %v98
    %vm125 = vcmp.eq.s32.totalorder %v107, %v98
    %vm126 = vcmp.eq.s32.totalorder %v110, %v98
    %vm127 = vcmp.eq.s32.totalorder %v113, %v98
    %vm128 = vcmp.eq.s32.totalorder %v116, %v98
    %vm129 = vcmp.eq.s32.totalorder %v119, %v98
    %vm130 = vcmp.eq.s32.totalorder %v122, %v98
    %v131 = vsel %vm123, 1, 0
    %v132 = vsel %vm124, 1, 0
    %v133 = vsel %vm125, 1, 0
    %v134 = vsel %vm126, 1, 0
    %v135 = vsel %vm127, 1, 0
    %v136 = vsel %vm128, 1, 0
    %v137 = vsel %vm129, 1, 0
    %v138 = vsel %vm130, 1, 0
    %v139 = vcvt.s32.f32 %v131
    %v140 = vcvt.s32.f32 %v132
    %v141 = vcvt.s32.f32 %v133
    %v142 = vcvt.s32.f32 %v134
    %v143 = vcvt.s32.f32 %v135
    %v144 = vcvt.s32.f32 %v136
    %v145 = vcvt.s32.f32 %v137
    %v146 = vcvt.s32.f32 %v138
    %v147 = vld [vmem:[%s5] sm:$0xff]
    %v148 = vld [vmem:[%s5 + $0x8] sm:$0xff]
    %v149 = vld [vmem:[%s5 + $0x10] sm:$0xff]
    %v150 = vld [vmem:[%s5 + $0x18] sm:$0xff]
    %v151 = vld [vmem:[%s5 + $0x20] sm:$0xff]
    %v152 = vld [vmem:[%s5 + $0x28] sm:$0xff]
    %v153 = vld [vmem:[%s5 + $0x30] sm:$0xff]
    %v154 = vld [vmem:[%s5 + $0x38] sm:$0xff]
    %155 = vset.pattern.permute.xlu0 0
    %156 = vperm.xlu0 %155, %v147
    %v157 = vpop.permute.xlu0 %156
    %158 = vset.pattern.permute.xlu0 0
    %159 = vperm.xlu0 %158, %v148
    %v160 = vpop.permute.xlu0 %159
    %161 = vset.pattern.permute.xlu0 0
    %162 = vperm.xlu0 %161, %v149
    %v163 = vpop.permute.xlu0 %162
    %164 = vset.pattern.permute.xlu0 0
    %165 = vperm.xlu0 %164, %v150
    %v166 = vpop.permute.xlu0 %165
    %167 = vset.pattern.permute.xlu0 0
    %168 = vperm.xlu0 %167, %v151
    %v169 = vpop.permute.xlu0 %168
    %170 = vset.pattern.permute.xlu0 0
    %171 = vperm.xlu0 %170, %v152
    %v172 = vpop.permute.xlu0 %171
    %173 = vset.pattern.permute.xlu0 0
    %174 = vperm.xlu0 %173, %v153
    %v175 = vpop.permute.xlu0 %174
    %176 = vset.pattern.permute.xlu0 0
    %177 = vperm.xlu0 %176, %v154
    %v178 = vpop.permute.xlu0 %177
    %vm179 = vcmp.eq.s32.totalorder %v157, %v98
    %vm180 = vcmp.eq.s32.totalorder %v160, %v98
    %vm181 = vcmp.eq.s32.totalorder %v163, %v98
    %vm182 = vcmp.eq.s32.totalorder %v166, %v98
    %vm183 = vcmp.eq.s32.totalorder %v169, %v98
    %vm184 = vcmp.eq.s32.totalorder %v172, %v98
    %vm185 = vcmp.eq.s32.totalorder %v175, %v98
    %vm186 = vcmp.eq.s32.totalorder %v178, %v98
    %v187 = vsel %vm179, 1, 0
    %v188 = vsel %vm180, 1, 0
    %v189 = vsel %vm181, 1, 0
    %v190 = vsel %vm182, 1, 0
    %v191 = vsel %vm183, 1, 0
    %v192 = vsel %vm184, 1, 0
    %v193 = vsel %vm185, 1, 0
    %v194 = vsel %vm186, 1, 0
    %v195 = vcvt.s32.f32 %v187
    %v196 = vcvt.s32.f32 %v188
    %v197 = vcvt.s32.f32 %v189
    %v198 = vcvt.s32.f32 %v190
    %v199 = vcvt.s32.f32 %v191
    %v200 = vcvt.s32.f32 %v192
    %v201 = vcvt.s32.f32 %v193
    %v202 = vcvt.s32.f32 %v194
    %v203 = vld [vmem:[%s1] sm:$0xff]
    %v204 = vld [vmem:[%s1 + $0x8] sm:$0xff]
    %v205 = vld [vmem:[%s1 + $0x10] sm:$0xff]
    %v206 = vld [vmem:[%s1 + $0x18] sm:$0xff]
    %v207 = vld [vmem:[%s1 + $0x20] sm:$0xff]
    %v208 = vld [vmem:[%s8] sm:$0xff]
    %v209 = vld [vmem:[%s8 + $0x8] sm:$0xff]
    %v210 = vld [vmem:[%s8 + $0x10] sm:$0xff]
    %v211 = vld [vmem:[%s8 + $0x18] sm:$0xff]
    %vm212 = vcmask 261120
    %v214 = vsel %vm212, %v203, 0
    %v217 = vsel %vm212, %v204, 0
    %v220 = vsel %vm212, %v205, 0
    %v223 = vsel %vm212, %v206, 0
    %v226 = vsel %vm212, %v207, 0
    %228 = vmatprep.subr.mxu0 0.0
    %229 = vmatpush1.msra.mxu0 %v208
    %230 = vmatprep.subr.mxu0 0.0
    %231 = vmatpush1.msra.mxu0 %v209
    %232 = vmatprep.subr.mxu0 0.0
    %233 = vmatpush1.msra.mxu0 %v210
    %234 = vmatprep.subr.mxu0 0.0
    %235 = vmatpush1.msra.mxu0 %v211
    %236 = vmatprep.subr.mxu0 0.0
    %237 = vmatpush1.msra.mxu0 0.0
    %238 = vmatprep.subr.mxu0 0.0
    %239 = vmatpush1.msra.mxu0 0.0
    %240 = vmatprep.subr.mxu0 0.0
    %241 = vmatpush1.msra.mxu0 0.0
    %242 = vmatprep.subr.mxu0 0.0
    %243 = vmatpush1.msra.mxu0 0.0
    %244 = vmatprep.subr.mxu0 0.0
    %245 = vmatpush1.msra.mxu0 0.0
    %246 = vmatprep.subr.mxu0 0.0
    %247 = vmatpush1.msra.mxu0 0.0
    %248 = vmatprep.subr.mxu0 0.0
    %249 = vmatpush1.msra.mxu0 0.0
    %250 = vmatprep.subr.mxu0 0.0
    %251 = vmatpush1.msra.mxu0 0.0
    %252 = vmatprep.subr.mxu0 0.0
    %253 = vmatpush1.msra.mxu0 0.0
    %254 = vmatprep.subr.mxu0 0.0
    %255 = vmatpush1.msra.mxu0 0.0
    %256 = vmatprep.subr.mxu0 0.0
    %257 = vmatpush1.msra.mxu0 0.0
    %258 = vmatprep.subr.mxu0 0.0
    %259 = vmatpush1.msra.mxu0 0.0
    %260 = vmatprep.subr.mxu0 0.0
    %261 = vmatpush1.msra.mxu0 0.0
    %262 = vmatprep.subr.mxu0 0.0
    %263 = vmatpush1.msra.mxu0 0.0
    %264 = vmatprep.subr.mxu0 0.0
    %265 = vmatpush1.msra.mxu0 0.0
    %266 = vmatprep.subr.mxu0 0.0
    %267 = vmatpush1.msra.mxu0 0.0
    %268 = vmatprep.subr.mxu0 0.0
    %269 = vmatpush1.msra.mxu0 0.0
    %270 = vmatprep.subr.mxu0 0.0
    %271 = vmatpush1.msra.mxu0 0.0
    %272 = vmatprep.subr.mxu0 0.0
    %273 = vmatpush1.msra.mxu0 0.0
    %274 = vmatprep.subr.mxu0 0.0
    %275 = vmatpush1.msra.mxu0 0.0
    %276 = vmatprep.subr.mxu0 0.0
    %277 = vmatpush1.msra.mxu0 0.0
    %278 = vmatprep.subr.mxu0 0.0
    %279 = vmatpush1.msra.mxu0 0.0
    %280 = vmatprep.subr.mxu0 0.0
    %281 = vmatpush1.msra.mxu0 0.0
    %282 = vmatprep.subr.mxu0 0.0
    %283 = vmatpush1.msra.mxu0 0.0
    %284 = vmatprep.subr.mxu0 0.0
    %285 = vmatpush1.msra.mxu0 0.0
    %286 = vmatprep.subr.mxu0 0.0
    %287 = vmatpush1.msra.mxu0 0.0
    %288 = vmatprep.subr.mxu0 0.0
    %289 = vmatpush1.msra.mxu0 0.0
    %290 = vmatprep.subr.mxu0 0.0
    %291 = vmatpush1.msra.mxu0 0.0
    %292 = vmatprep.mubr.f32.mxu0 0.0
    %293 = vmatmul.mubr.f32.gmra.mrb[0].mxu0 %v214
    %v294 = vpop.f32.mrb[0].mxu0
    %v295 = vadd.f32 0.0, %v294
    %v296 = vpop.f32.mrb[0].mxu0
    %297 = vmatprep.mubr.f32.mxu0 0.0
    %298 = vmatmul.mubr.f32.gmra.mrb[0].mxu0 %v217
    %v299 = vpop.f32.mrb[0].mxu0
    %v300 = vadd.f32 0.0, %v299
    %v301 = vpop.f32.mrb[0].mxu0
    %302 = vmatprep.mubr.f32.mxu0 0.0
    %303 = vmatmul.mubr.f32.gmra.mrb[0].mxu0 %v220
    %v304 = vpop.f32.mrb[0].mxu0
    %v305 = vadd.f32 0.0, %v304
    %v306 = vpop.f32.mrb[0].mxu0
    %307 = vmatprep.mubr.f32.mxu0 0.0
    %308 = vmatmul.mubr.f32.gmra.mrb[0].mxu0 %v223
    %v309 = vpop.f32.mrb[0].mxu0
    %v310 = vadd.f32 0.0, %v309
    %v311 = vpop.f32.mrb[0].mxu0
    %312 = vmatprep.mubr.f32.mxu0 0.0
    %313 = vmatmul.mubr.f32.gmra.mrb[0].mxu0 %v226
    %v314 = vpop.f32.mrb[0].mxu0
    %v315 = vadd.f32 0.0, %v314
    %v316 = vpop.f32.mrb[0].mxu0
    %317 = vdwg.mxu0
    %v318 = vld [vmem:[%s0] sm:$0xff]
    %v319 = vld [vmem:[%s0 + $0x8] sm:$0xff]
    %v320 = vld [vmem:[%s0 + $0x10] sm:$0xff]
    %v321 = vld [vmem:[%s0 + $0x18] sm:$0xff]
    %vm322 = vcmask 326656
    %v324 = vsel %vm322, %v195, 0
    %v327 = vsel %vm322, %v196, 0
    %v330 = vsel %vm322, %v197, 0
    %v333 = vsel %vm322, %v198, 0
    %v336 = vsel %vm322, %v199, 0
    %v339 = vsel %vm322, %v200, 0
    %v342 = vsel %vm322, %v201, 0
    %v345 = vsel %vm322, %v202, 0
    %347 = vmatprep.subr.mxu0 0.0
    %348 = vmatpush1.msra.mxu0 %v295
    %349 = vmatprep.subr.mxu0 0.0
    %350 = vmatpush1.msra.mxu0 %v300
    %351 = vmatprep.subr.mxu0 0.0
    %352 = vmatpush1.msra.mxu0 %v305
    %353 = vmatprep.subr.mxu0 0.0
    %354 = vmatpush1.msra.mxu0 %v310
    %355 = vmatprep.subr.mxu0 0.0
    %356 = vmatpush1.msra.mxu0 %v315
    %357 = vmatprep.subr.mxu0 0.0
    %358 = vmatpush1.msra.mxu0 0.0
    %359 = vmatprep.subr.mxu0 0.0
    %360 = vmatpush1.msra.mxu0 0.0
    %361 = vmatprep.subr.mxu0 0.0
    %362 = vmatpush1.msra.mxu0 0.0
    %363 = vmatprep.subr.mxu0 0.0
    %364 = vmatpush1.msra.mxu0 0.0
    %365 = vmatprep.subr.mxu0 0.0
    %366 = vmatpush1.msra.mxu0 0.0
    %367 = vmatprep.subr.mxu0 0.0
    %368 = vmatpush1.msra.mxu0 0.0
    %369 = vmatprep.subr.mxu0 0.0
    %370 = vmatpush1.msra.mxu0 0.0
    %371 = vmatprep.subr.mxu0 0.0
    %372 = vmatpush1.msra.mxu0 0.0
    %373 = vmatprep.subr.mxu0 0.0
    %374 = vmatpush1.msra.mxu0 0.0
    %375 = vmatprep.subr.mxu0 0.0
    %376 = vmatpush1.msra.mxu0 0.0
    %377 = vmatprep.subr.mxu0 0.0
    %378 = vmatpush1.msra.mxu0 0.0
    %379 = vmatprep.subr.mxu0 0.0
    %380 = vmatpush1.msra.mxu0 0.0
    %381 = vmatprep.subr.mxu0 0.0
    %382 = vmatpush1.msra.mxu0 0.0
    %383 = vmatprep.subr.mxu0 0.0
    %384 = vmatpush1.msra.mxu0 0.0
    %385 = vmatprep.subr.mxu0 0.0
    %386 = vmatpush1.msra.mxu0 0.0
    %387 = vmatprep.subr.mxu0 0.0
    %388 = vmatpush1.msra.mxu0 0.0
    %389 = vmatprep.subr.mxu0 0.0
    %390 = vmatpush1.msra.mxu0 0.0
    %391 = vmatprep.subr.mxu0 0.0
    %392 = vmatpush1.msra.mxu0 0.0
    %393 = vmatprep.subr.mxu0 0.0
    %394 = vmatpush1.msra.mxu0 0.0
    %395 = vmatprep.subr.mxu0 0.0
    %396 = vmatpush1.msra.mxu0 0.0
    %397 = vmatprep.subr.mxu0 0.0
    %398 = vmatpush1.msra.mxu0 0.0
    %399 = vmatprep.subr.mxu0 0.0
    %400 = vmatpush1.msra.mxu0 0.0
    %401 = vmatprep.subr.mxu0 0.0
    %402 = vmatpush1.msra.mxu0 0.0
    %403 = vmatprep.subr.mxu0 0.0
    %404 = vmatpush1.msra.mxu0 0.0
    %405 = vmatprep.subr.mxu0 0.0
    %406 = vmatpush1.msra.mxu0 0.0
    %407 = vmatprep.subr.mxu0 0.0
    %408 = vmatpush1.msra.mxu0 0.0
    %409 = vmatprep.subr.mxu0 0.0
    %410 = vmatpush1.msra.mxu0 0.0
    %411 = vmatprep.mubr.f32.mxu0 0.0
    %412 = vmatmul.mubr.f32.gmra.mrb[0].mxu0 %v324
    %v413 = vpop.f32.mrb[0].mxu0
    %v414 = vadd.f32 0.0, %v413
    %v415 = vpop.f32.mrb[0].mxu0
    %416 = vmatprep.mubr.f32.mxu0 0.0
    %417 = vmatmul.mubr.f32.gmra.mrb[0].mxu0 %v327
    %v418 = vpop.f32.mrb[0].mxu0
    %v419 = vadd.f32 0.0, %v418
    %v420 = vpop.f32.mrb[0].mxu0
    %421 = vmatprep.mubr.f32.mxu0 0.0
    %422 = vmatmul.mubr.f32.gmra.mrb[0].mxu0 %v330
    %v423 = vpop.f32.mrb[0].mxu0
    %v424 = vadd.f32 0.0, %v423
    %v425 = vpop.f32.mrb[0].mxu0
    %426 = vmatprep.mubr.f32.mxu0 0.0
    %427 = vmatmul.mubr.f32.gmra.mrb[0].mxu0 %v333
    %v428 = vpop.f32.mrb[0].mxu0
    %v429 = vadd.f32 0.0, %v428
    %v430 = vpop.f32.mrb[0].mxu0
    %431 = vmatprep.mubr.f32.mxu0 0.0
    %432 = vmatmul.mubr.f32.gmra.mrb[0].mxu0 %v336
    %v433 = vpop.f32.mrb[0].mxu0
    %v434 = vadd.f32 0.0, %v433
    %v435 = vpop.f32.mrb[0].mxu0
    %436 = vmatprep.mubr.f32.mxu0 0.0
    %437 = vmatmul.mubr.f32.gmra.mrb[0].mxu0 %v339
    %v438 = vpop.f32.mrb[0].mxu0
    %v439 = vadd.f32 0.0, %v438
    %v440 = vpop.f32.mrb[0].mxu0
    %441 = vmatprep.mubr.f32.mxu0 0.0
    %442 = vmatmul.mubr.f32.gmra.mrb[0].mxu0 %v342
    %v443 = vpop.f32.mrb[0].mxu0
    %v444 = vadd.f32 0.0, %v443
    %v445 = vpop.f32.mrb[0].mxu0
    %446 = vmatprep.mubr.f32.mxu0 0.0
    %447 = vmatmul.mubr.f32.gmra.mrb[0].mxu0 %v345
    %v448 = vpop.f32.mrb[0].mxu0
    %v449 = vadd.f32 0.0, %v448
    %v450 = vpop.f32.mrb[0].mxu0
    %451 = vdwg.mxu0
    %v453 = vsel %vm212, %v139, 0
    %v456 = vsel %vm212, %v140, 0
    %v459 = vsel %vm212, %v141, 0
    %v462 = vsel %vm212, %v142, 0
    %v465 = vsel %vm212, %v143, 0
    %v468 = vsel %vm212, %v144, 0
    %v471 = vsel %vm212, %v145, 0
    %v474 = vsel %vm212, %v146, 0
    %476 = vmatprep.subr.mxu0 0.0
    %477 = vmatpush1.msra.mxu0 %v318
    %478 = vmatprep.subr.mxu0 0.0
    %479 = vmatpush1.msra.mxu0 %v319
    %480 = vmatprep.subr.mxu0 0.0
    %481 = vmatpush1.msra.mxu0 %v320
    %482 = vmatprep.subr.mxu0 0.0
    %483 = vmatpush1.msra.mxu0 %v321
    %484 = vmatprep.subr.mxu0 0.0
    %485 = vmatpush1.msra.mxu0 0.0
    %486 = vmatprep.subr.mxu0 0.0
    %487 = vmatpush1.msra.mxu0 0.0
    %488 = vmatprep.subr.mxu0 0.0
    %489 = vmatpush1.msra.mxu0 0.0
    %490 = vmatprep.subr.mxu0 0.0
    %491 = vmatpush1.msra.mxu0 0.0
    %492 = vmatprep.subr.mxu0 0.0
    %493 = vmatpush1.msra.mxu0 0.0
    %494 = vmatprep.subr.mxu0 0.0
    %495 = vmatpush1.msra.mxu0 0.0
    %496 = vmatprep.subr.mxu0 0.0
    %497 = vmatpush1.msra.mxu0 0.0
    %498 = vmatprep.subr.mxu0 0.0
    %499 = vmatpush1.msra.mxu0 0.0
    %500 = vmatprep.subr.mxu0 0.0
    %501 = vmatpush1.msra.mxu0 0.0
    %502 = vmatprep.subr.mxu0 0.0
    %503 = vmatpush1.msra.mxu0 0.0
    %504 = vmatprep.subr.mxu0 0.0
    %505 = vmatpush1.msra.mxu0 0.0
    %506 = vmatprep.subr.mxu0 0.0
    %507 = vmatpush1.msra.mxu0 0.0
    %508 = vmatprep.subr.mxu0 0.0
    %509 = vmatpush1.msra.mxu0 0.0
    %510 = vmatprep.subr.mxu0 0.0
    %511 = vmatpush1.msra.mxu0 0.0
    %512 = vmatprep.subr.mxu0 0.0
    %513 = vmatpush1.msra.mxu0 0.0
    %514 = vmatprep.subr.mxu0 0.0
    %515 = vmatpush1.msra.mxu0 0.0
    %516 = vmatprep.subr.mxu0 0.0
    %517 = vmatpush1.msra.mxu0 0.0
    %518 = vmatprep.subr.mxu0 0.0
    %519 = vmatpush1.msra.mxu0 0.0
    %520 = vmatprep.subr.mxu0 0.0
    %521 = vmatpush1.msra.mxu0 0.0
    %522 = vmatprep.subr.mxu0 0.0
    %523 = vmatpush1.msra.mxu0 0.0
    %524 = vmatprep.subr.mxu0 0.0
    %525 = vmatpush1.msra.mxu0 0.0
    %526 = vmatprep.subr.mxu0 0.0
    %527 = vmatpush1.msra.mxu0 0.0
    %528 = vmatprep.subr.mxu0 0.0
    %529 = vmatpush1.msra.mxu0 0.0
    %530 = vmatprep.subr.mxu0 0.0
    %531 = vmatpush1.msra.mxu0 0.0
    %532 = vmatprep.subr.mxu0 0.0
    %533 = vmatpush1.msra.mxu0 0.0
    %534 = vmatprep.subr.mxu0 0.0
    %535 = vmatpush1.msra.mxu0 0.0
    %536 = vmatprep.subr.mxu0 0.0
    %537 = vmatpush1.msra.mxu0 0.0
    %538 = vmatprep.subr.mxu0 0.0
    %539 = vmatpush1.msra.mxu0 0.0
    %540 = vmatprep.mubr.f32.mxu0 0.0
    %541 = vmatmul.mubr.f32.gmra.mrb[0].mxu0 %v453
    %v542 = vpop.f32.mrb[0].mxu0
    %v543 = vadd.f32 %v414, %v542
    %v544 = vpop.f32.mrb[0].mxu0
    %545 = vmatprep.mubr.f32.mxu0 0.0
    %546 = vmatmul.mubr.f32.gmra.mrb[0].mxu0 %v456
    %v547 = vpop.f32.mrb[0].mxu0
    %v548 = vadd.f32 %v419, %v547
    %v549 = vpop.f32.mrb[0].mxu0
    %550 = vmatprep.mubr.f32.mxu0 0.0
    %551 = vmatmul.mubr.f32.gmra.mrb[0].mxu0 %v459
    %v552 = vpop.f32.mrb[0].mxu0
    %v553 = vadd.f32 %v424, %v552
    %v554 = vpop.f32.mrb[0].mxu0
    %555 = vmatprep.mubr.f32.mxu0 0.0
    %556 = vmatmul.mubr.f32.gmra.mrb[0].mxu0 %v462
    %v557 = vpop.f32.mrb[0].mxu0
    %v558 = vadd.f32 %v429, %v557
    %v559 = vpop.f32.mrb[0].mxu0
    %560 = vmatprep.mubr.f32.mxu0 0.0
    %561 = vmatmul.mubr.f32.gmra.mrb[0].mxu0 %v465
    %v562 = vpop.f32.mrb[0].mxu0
    %v563 = vadd.f32 %v434, %v562
    %v564 = vpop.f32.mrb[0].mxu0
    %565 = vmatprep.mubr.f32.mxu0 0.0
    %566 = vmatmul.mubr.f32.gmra.mrb[0].mxu0 %v468
    %v567 = vpop.f32.mrb[0].mxu0
    %v568 = vadd.f32 %v439, %v567
    %v569 = vpop.f32.mrb[0].mxu0
    %570 = vmatprep.mubr.f32.mxu0 0.0
    %571 = vmatmul.mubr.f32.gmra.mrb[0].mxu0 %v471
    %v572 = vpop.f32.mrb[0].mxu0
    %v573 = vadd.f32 %v444, %v572
    %v574 = vpop.f32.mrb[0].mxu0
    %575 = vmatprep.mubr.f32.mxu0 0.0
    %576 = vmatmul.mubr.f32.gmra.mrb[0].mxu0 %v474
    %v577 = vpop.f32.mrb[0].mxu0
    %v578 = vadd.f32 %v449, %v577
    %v579 = vpop.f32.mrb[0].mxu0
    %580 = vdwg.mxu0
    %v581 = vld [vmem:[%s2] sm:$0xff]
    %v582 = vld [vmem:[%s2 + $0x8] sm:$0xff]
    %v583 = vld [vmem:[%s2 + $0x10] sm:$0xff]
    %v584 = vld [vmem:[%s2 + $0x18] sm:$0xff]
    %v585 = vld [vmem:[%s2 + $0x20] sm:$0xff]
    %v586 = vld [vmem:[%s2 + $0x28] sm:$0xff]
    %v587 = vld [vmem:[%s2 + $0x30] sm:$0xff]
    %v588 = vld [vmem:[%s2 + $0x38] sm:$0xff]
    %v589 = vld [vmem:[%s9] sm:$0xff]
    %v590 = vld [vmem:[%s9 + $0x8] sm:$0xff]
    %vm591 = vcmask 130048
    %v593 = vsel %vm591, %v581, 0
    %v596 = vsel %vm591, %v582, 0
    %v599 = vsel %vm591, %v583, 0
    %v602 = vsel %vm591, %v584, 0
    %v605 = vsel %vm591, %v585, 0
    %v608 = vsel %vm591, %v586, 0
    %v611 = vsel %vm591, %v587, 0
    %v614 = vsel %vm591, %v588, 0
    %616 = vmatprep.subr.mxu0 0.0
    %617 = vmatpush1.msra.mxu0 %v589
    %618 = vmatprep.subr.mxu0 0.0
    %619 = vmatpush1.msra.mxu0 %v590
    %620 = vmatprep.subr.mxu0 0.0
    %621 = vmatpush1.msra.mxu0 0.0
    %622 = vmatprep.subr.mxu0 0.0
    %623 = vmatpush1.msra.mxu0 0.0
    %624 = vmatprep.subr.mxu0 0.0
    %625 = vmatpush1.msra.mxu0 0.0
    %626 = vmatprep.subr.mxu0 0.0
    %627 = vmatpush1.msra.mxu0 0.0
    %628 = vmatprep.subr.mxu0 0.0
    %629 = vmatpush1.msra.mxu0 0.0
    %630 = vmatprep.subr.mxu0 0.0
    %631 = vmatpush1.msra.mxu0 0.0
    %632 = vmatprep.subr.mxu0 0.0
    %633 = vmatpush1.msra.mxu0 0.0
    %634 = vmatprep.subr.mxu0 0.0
    %635 = vmatpush1.msra.mxu0 0.0
    %636 = vmatprep.subr.mxu0 0.0
    %637 = vmatpush1.msra.mxu0 0.0
    %638 = vmatprep.subr.mxu0 0.0
    %639 = vmatpush1.msra.mxu0 0.0
    %640 = vmatprep.subr.mxu0 0.0
    %641 = vmatpush1.msra.mxu0 0.0
    %642 = vmatprep.subr.mxu0 0.0
    %643 = vmatpush1.msra.mxu0 0.0
    %644 = vmatprep.subr.mxu0 0.0
    %645 = vmatpush1.msra.mxu0 0.0
    %646 = vmatprep.subr.mxu0 0.0
    %647 = vmatpush1.msra.mxu0 0.0
    %648 = vmatprep.subr.mxu0 0.0
    %649 = vmatpush1.msra.mxu0 0.0
    %650 = vmatprep.subr.mxu0 0.0
    %651 = vmatpush1.msra.mxu0 0.0
    %652 = vmatprep.subr.mxu0 0.0
    %653 = vmatpush1.msra.mxu0 0.0
    %654 = vmatprep.subr.mxu0 0.0
    %655 = vmatpush1.msra.mxu0 0.0
    %656 = vmatprep.subr.mxu0 0.0
    %657 = vmatpush1.msra.mxu0 0.0
    %658 = vmatprep.subr.mxu0 0.0
    %659 = vmatpush1.msra.mxu0 0.0
    %660 = vmatprep.subr.mxu0 0.0
    %661 = vmatpush1.msra.mxu0 0.0
    %662 = vmatprep.subr.mxu0 0.0
    %663 = vmatpush1.msra.mxu0 0.0
    %664 = vmatprep.subr.mxu0 0.0
    %665 = vmatpush1.msra.mxu0 0.0
    %666 = vmatprep.subr.mxu0 0.0
    %667 = vmatpush1.msra.mxu0 0.0
    %668 = vmatprep.subr.mxu0 0.0
    %669 = vmatpush1.msra.mxu0 0.0
    %670 = vmatprep.subr.mxu0 0.0
    %671 = vmatpush1.msra.mxu0 0.0
    %672 = vmatprep.subr.mxu0 0.0
    %673 = vmatpush1.msra.mxu0 0.0
    %674 = vmatprep.subr.mxu0 0.0
    %675 = vmatpush1.msra.mxu0 0.0
    %676 = vmatprep.subr.mxu0 0.0
    %677 = vmatpush1.msra.mxu0 0.0
    %678 = vmatprep.subr.mxu0 0.0
    %679 = vmatpush1.msra.mxu0 0.0
    %680 = vmatprep.mubr.f32.mxu0 0.0
    %681 = vmatmul.mubr.f32.gmra.mrb[0].mxu0 %v593
    %v682 = vpop.f32.mrb[0].mxu0
    %v683 = vadd.f32 0.0, %v682
    %v684 = vpop.f32.mrb[0].mxu0
    %685 = vmatprep.mubr.f32.mxu0 0.0
    %686 = vmatmul.mubr.f32.gmra.mrb[0].mxu0 %v596
    %v687 = vpop.f32.mrb[0].mxu0
    %v688 = vadd.f32 0.0, %v687
    %v689 = vpop.f32.mrb[0].mxu0
    %690 = vmatprep.mubr.f32.mxu0 0.0
    %691 = vmatmul.mubr.f32.gmra.mrb[0].mxu0 %v599
    %v692 = vpop.f32.mrb[0].mxu0
    %v693 = vadd.f32 0.0, %v692
    %v694 = vpop.f32.mrb[0].mxu0
    %695 = vmatprep.mubr.f32.mxu0 0.0
    %696 = vmatmul.mubr.f32.gmra.mrb[0].mxu0 %v602
    %v697 = vpop.f32.mrb[0].mxu0
    %v698 = vadd.f32 0.0, %v697
    %v699 = vpop.f32.mrb[0].mxu0
    %700 = vmatprep.mubr.f32.mxu0 0.0
    %701 = vmatmul.mubr.f32.gmra.mrb[0].mxu0 %v605
    %v702 = vpop.f32.mrb[0].mxu0
    %v703 = vadd.f32 0.0, %v702
    %v704 = vpop.f32.mrb[0].mxu0
    %705 = vmatprep.mubr.f32.mxu0 0.0
    %706 = vmatmul.mubr.f32.gmra.mrb[0].mxu0 %v608
    %v707 = vpop.f32.mrb[0].mxu0
    %v708 = vadd.f32 0.0, %v707
    %v709 = vpop.f32.mrb[0].mxu0
    %710 = vmatprep.mubr.f32.mxu0 0.0
    %711 = vmatmul.mubr.f32.gmra.mrb[0].mxu0 %v611
    %v712 = vpop.f32.mrb[0].mxu0
    %v713 = vadd.f32 0.0, %v712
    %v714 = vpop.f32.mrb[0].mxu0
    %715 = vmatprep.mubr.f32.mxu0 0.0
    %716 = vmatmul.mubr.f32.gmra.mrb[0].mxu0 %v614
    %v717 = vpop.f32.mrb[0].mxu0
    %v718 = vadd.f32 0.0, %v717
    %v719 = vpop.f32.mrb[0].mxu0
    %720 = vdwg.mxu0
    %v721 = vadd.f32 %v543, %v683
    %v722 = vadd.f32 %v548, %v688
    %v723 = vadd.f32 %v553, %v693
    %v724 = vadd.f32 %v558, %v698
    %v725 = vadd.f32 %v563, %v703
    %v726 = vadd.f32 %v568, %v708
    %v727 = vadd.f32 %v573, %v713
    %v728 = vadd.f32 %v578, %v718
    %v729 = vld [vmem:[%s10] sm:$0x1]
    %v731 = vlaneseq
    %v732 = vshrl.u32 %v731, 7
    %v733 = vsub.s32 0, %v732
    %v734 = vrot.slane %v729, %v733
    %v736 = vadd.f32 %v721, %v734
    %v737 = vadd.f32 %v722, %v734
    %v738 = vadd.f32 %v723, %v734
    %v739 = vadd.f32 %v724, %v734
    %v740 = vadd.f32 %v725, %v734
    %v741 = vadd.f32 %v726, %v734
    %v742 = vadd.f32 %v727, %v734
    %v743 = vadd.f32 %v728, %v734
    %v744 = vsel %vm212, %v736, 0.0
    %745 = vadd.xlane.f32.xlu0 %v744
    %v746 = vpop.xlane.xlu0 %745
    %v747 = vsel %vm212, %v737, 0.0
    %748 = vadd.xlane.f32.xlu0 %v747
    %v749 = vpop.xlane.xlu0 %748
    %v750 = vsel %vm212, %v738, 0.0
    %751 = vadd.xlane.f32.xlu0 %v750
    %v752 = vpop.xlane.xlu0 %751
    %v753 = vsel %vm212, %v739, 0.0
    %754 = vadd.xlane.f32.xlu0 %v753
    %v755 = vpop.xlane.xlu0 %754
    %v756 = vsel %vm212, %v740, 0.0
    %757 = vadd.xlane.f32.xlu0 %v756
    %v758 = vpop.xlane.xlu0 %757
    %v759 = vsel %vm212, %v741, 0.0
    %760 = vadd.xlane.f32.xlu0 %v759
    %v761 = vpop.xlane.xlu0 %760
    %v762 = vsel %vm212, %v742, 0.0
    %763 = vadd.xlane.f32.xlu0 %v762
    %v764 = vpop.xlane.xlu0 %763
    %v765 = vsel %vm212, %v743, 0.0
    %766 = vadd.xlane.f32.xlu0 %v765
    %v767 = vpop.xlane.xlu0 %766
    %v768 = vrcp.pop 32.0
    %v769 = vmul.f32 %v746, %v768
    %v770 = vmul.f32 %v749, %v768
    %v771 = vmul.f32 %v752, %v768
    %v772 = vmul.f32 %v755, %v768
    %v773 = vmul.f32 %v758, %v768
    %v774 = vmul.f32 %v761, %v768
    %v775 = vmul.f32 %v764, %v768
    %v776 = vmul.f32 %v767, %v768
    %v777 = vsub.f32 %v736, %v769
    %v778 = vsub.f32 %v737, %v770
    %v779 = vsub.f32 %v738, %v771
    %v780 = vsub.f32 %v739, %v772
    %v781 = vsub.f32 %v740, %v773
    %v782 = vsub.f32 %v741, %v774
    %v783 = vsub.f32 %v742, %v775
    %v784 = vsub.f32 %v743, %v776
    %v785 = vmul.f32 %v777, %v777
    %v786 = vmul.f32 %v778, %v778
    %v787 = vmul.f32 %v779, %v779
    %v788 = vmul.f32 %v780, %v780
    %v789 = vmul.f32 %v781, %v781
    %v790 = vmul.f32 %v782, %v782
    %v791 = vmul.f32 %v783, %v783
    %v792 = vmul.f32 %v784, %v784
    %v793 = vsel %vm212, %v785, 0.0
    %794 = vadd.xlane.f32.xlu0 %v793
    %v795 = vpop.xlane.xlu0 %794
    %v796 = vsel %vm212, %v786, 0.0
    %797 = vadd.xlane.f32.xlu0 %v796
    %v798 = vpop.xlane.xlu0 %797
    %v799 = vsel %vm212, %v787, 0.0
    %800 = vadd.xlane.f32.xlu0 %v799
    %v801 = vpop.xlane.xlu0 %800
    %v802 = vsel %vm212, %v788, 0.0
    %803 = vadd.xlane.f32.xlu0 %v802
    %v804 = vpop.xlane.xlu0 %803
    %v805 = vsel %vm212, %v789, 0.0
    %806 = vadd.xlane.f32.xlu0 %v805
    %v807 = vpop.xlane.xlu0 %806
    %v808 = vsel %vm212, %v790, 0.0
    %809 = vadd.xlane.f32.xlu0 %v808
    %v810 = vpop.xlane.xlu0 %809
    %v811 = vsel %vm212, %v791, 0.0
    %812 = vadd.xlane.f32.xlu0 %v811
    %v813 = vpop.xlane.xlu0 %812
    %v814 = vsel %vm212, %v792, 0.0
    %815 = vadd.xlane.f32.xlu0 %v814
    %v816 = vpop.xlane.xlu0 %815
    %v817 = vmul.f32 %v795, %v768
    %v818 = vmul.f32 %v798, %v768
    %v819 = vmul.f32 %v801, %v768
    %v820 = vmul.f32 %v804, %v768
    %v821 = vmul.f32 %v807, %v768
    %v822 = vmul.f32 %v810, %v768
    %v823 = vmul.f32 %v813, %v768
    %v824 = vmul.f32 %v816, %v768
    %v825 = vadd.f32 %v817, 1e-05
    %v826 = vadd.f32 %v818, 1e-05
    %v827 = vadd.f32 %v819, 1e-05
    %v828 = vadd.f32 %v820, 1e-05
    %v829 = vadd.f32 %v821, 1e-05
    %v830 = vadd.f32 %v822, 1e-05
    %v831 = vadd.f32 %v823, 1e-05
    %v832 = vadd.f32 %v824, 1e-05
    %v833 = vrsqrt.pop %v825
    %v834 = vrsqrt.pop %v826
    %v835 = vrsqrt.pop %v827
    %v836 = vrsqrt.pop %v828
    %v837 = vrsqrt.pop %v829
    %v838 = vrsqrt.pop %v830
    %v839 = vrsqrt.pop %v831
    %v840 = vrsqrt.pop %v832
    %v841 = vmul.f32 %v777, %v833
    %v842 = vmul.f32 %v778, %v834
    %v843 = vmul.f32 %v779, %v835
    %v844 = vmul.f32 %v780, %v836
    %v845 = vmul.f32 %v781, %v837
    %v846 = vmul.f32 %v782, %v838
    %v847 = vmul.f32 %v783, %v839
    %v848 = vmul.f32 %v784, %v840
    %v849 = vld [vmem:[%s11] sm:$0x1]
    %v851 = vlaneseq
    %v852 = vshrl.u32 %v851, 7
    %v853 = vsub.s32 0, %v852
    %v854 = vrot.slane %v849, %v853
    %v856 = vmul.f32 %v841, %v854
    %v857 = vmul.f32 %v842, %v854
    %v858 = vmul.f32 %v843, %v854
    %v859 = vmul.f32 %v844, %v854
    %v860 = vmul.f32 %v845, %v854
    %v861 = vmul.f32 %v846, %v854
    %v862 = vmul.f32 %v847, %v854
    %v863 = vmul.f32 %v848, %v854
    %v864 = vld [vmem:[%s12] sm:$0x1]
    %v866 = vlaneseq
    %v867 = vshrl.u32 %v866, 7
    %v868 = vsub.s32 0, %v867
    %v869 = vrot.slane %v864, %v868
    %v871 = vadd.f32 %v856, %v869
    %v872 = vadd.f32 %v857, %v869
    %v873 = vadd.f32 %v858, %v869
    %v874 = vadd.f32 %v859, %v869
    %v875 = vadd.f32 %v860, %v869
    %v876 = vadd.f32 %v861, %v869
    %v877 = vadd.f32 %v862, %v869
    %v878 = vadd.f32 %v863, %v869
    %879 = vst.msk [vmem:[#allocation2] sm:$0xff] %vm212, 0.0
    %880 = vst.msk [vmem:[#allocation2 + $0x8] sm:$0xff] %vm212, 0.0
    %881 = vst.msk [vmem:[#allocation2 + $0x10] sm:$0xff] %vm212, 0.0
    %882 = vst.msk [vmem:[#allocation2 + $0x18] sm:$0xff] %vm212, 0.0
    %883 = vst.msk [vmem:[#allocation2 + $0x20] sm:$0xff] %vm212, 0.0
    %884 = vst.msk [vmem:[#allocation2 + $0x28] sm:$0xff] %vm212, 0.0
    %885 = vst.msk [vmem:[#allocation2 + $0x30] sm:$0xff] %vm212, 0.0
    %886 = vst.msk [vmem:[#allocation2 + $0x38] sm:$0xff] %vm212, 0.0
    %887 = vst.msk [vmem:[#allocation2 + $0x40] sm:$0xff] %vm212, 0.0
    %888 = vst.msk [vmem:[#allocation2 + $0x48] sm:$0xff] %vm212, 0.0
    %889 = vst.msk [vmem:[#allocation2 + $0x50] sm:$0xff] %vm212, 0.0
    %890 = vst.msk [vmem:[#allocation2 + $0x58] sm:$0xff] %vm212, 0.0
    %891 = vst.msk [vmem:[#allocation2 + $0x60] sm:$0xff] %vm212, 0.0
    %892 = vst.msk [vmem:[#allocation2 + $0x68] sm:$0xff] %vm212, 0.0
    %893 = vst.msk [vmem:[#allocation2 + $0x70] sm:$0xff] %vm212, 0.0
    %894 = vst.msk [vmem:[#allocation2 + $0x78] sm:$0xff] %vm212, 0.0
    %895 = vst.msk [vmem:[#allocation2 + $0x4] sm:$0xff] %vm212, %v871
    %896 = vst.msk [vmem:[#allocation2 + $0x14] sm:$0xff] %vm212, %v872
    %897 = vst.msk [vmem:[#allocation2 + $0x24] sm:$0xff] %vm212, %v873
    %898 = vst.msk [vmem:[#allocation2 + $0x34] sm:$0xff] %vm212, %v874
    %899 = vst.msk [vmem:[#allocation2 + $0x44] sm:$0xff] %vm212, %v875
    %900 = vst.msk [vmem:[#allocation2 + $0x54] sm:$0xff] %vm212, %v876
    %901 = vst.msk [vmem:[#allocation2 + $0x64] sm:$0xff] %vm212, %v877
    %902 = vst.msk [vmem:[#allocation2 + $0x74] sm:$0xff] %vm212, %v878
    %v903 = vld [vmem:[%s13] sm:$0xff]
    %v904 = vld [vmem:[%s13 + $0x8] sm:$0x1]
    %v905 = vld [vmem:[#allocation2] sm:$0xff]
    %v906 = vld [vmem:[#allocation2 + $0x10] sm:$0xff]
    %v907 = vld [vmem:[#allocation2 + $0x20] sm:$0xff]
    %v908 = vld [vmem:[#allocation2 + $0x30] sm:$0xff]
    %v909 = vld [vmem:[#allocation2 + $0x40] sm:$0xff]
    %v910 = vld [vmem:[#allocation2 + $0x50] sm:$0xff]
    %v911 = vld [vmem:[#allocation2 + $0x60] sm:$0xff]
    %v912 = vld [vmem:[#allocation2 + $0x70] sm:$0xff]
    %v913 = vlaneseq
    %v914 = vshrl.u32 %v913, 7
    %v915 = vsub.s32 0, %v914
    %v916 = vrot.slane %v903, %v915
    %v917 = vmul.f32 %v905, %v916
    %v918 = vmul.f32 %v906, %v916
    %v919 = vmul.f32 %v907, %v916
    %v920 = vmul.f32 %v908, %v916
    %v921 = vmul.f32 %v909, %v916
    %v922 = vmul.f32 %v910, %v916
    %v923 = vmul.f32 %v911, %v916
    %v924 = vmul.f32 %v912, %v916
    %v925 = vadd.f32 %v917, 0.0
    %v926 = vadd.f32 %v918, 0.0
    %v927 = vadd.f32 %v919, 0.0
    %v928 = vadd.f32 %v920, 0.0
    %v929 = vadd.f32 %v921, 0.0
    %v930 = vadd.f32 %v922, 0.0
    %v931 = vadd.f32 %v923, 0.0
    %v932 = vadd.f32 %v924, 0.0
    %v933 = vld [vmem:[#allocation2 + $0x1] sm:$0xff]
    %v934 = vld [vmem:[#allocation2 + $0x11] sm:$0xff]
    %v935 = vld [vmem:[#allocation2 + $0x21] sm:$0xff]
    %v936 = vld [vmem:[#allocation2 + $0x31] sm:$0xff]
    %v937 = vld [vmem:[#allocation2 + $0x41] sm:$0xff]
    %v938 = vld [vmem:[#allocation2 + $0x51] sm:$0xff]
    %v939 = vld [vmem:[#allocation2 + $0x61] sm:$0xff]
    %v940 = vld [vmem:[#allocation2 + $0x71] sm:$0xff]
    %v941 = vlaneseq
    %v942 = vshrl.u32 %v941, 7
    %v943 = vsub.s32 1, %v942
    %v944 = vrot.slane %v903, %v943
    %v945 = vmul.f32 %v933, %v944
    %v946 = vmul.f32 %v934, %v944
    %v947 = vmul.f32 %v935, %v944
    %v948 = vmul.f32 %v936, %v944
    %v949 = vmul.f32 %v937, %v944
    %v950 = vmul.f32 %v938, %v944
    %v951 = vmul.f32 %v939, %v944
    %v952 = vmul.f32 %v940, %v944
    %v953 = vadd.f32 %v925, %v945
    %v954 = vadd.f32 %v926, %v946
    %v955 = vadd.f32 %v927, %v947
    %v956 = vadd.f32 %v928, %v948
    %v957 = vadd.f32 %v929, %v949
    %v958 = vadd.f32 %v930, %v950
    %v959 = vadd.f32 %v931, %v951
    %v960 = vadd.f32 %v932, %v952
    %v961 = vld [vmem:[#allocation2 + $0x2] sm:$0xff]
    %v962 = vld [vmem:[#allocation2 + $0x12] sm:$0xff]
    %v963 = vld [vmem:[#allocation2 + $0x22] sm:$0xff]
    %v964 = vld [vmem:[#allocation2 + $0x32] sm:$0xff]
    %v965 = vld [vmem:[#allocation2 + $0x42] sm:$0xff]
    %v966 = vld [vmem:[#allocation2 + $0x52] sm:$0xff]
    %v967 = vld [vmem:[#allocation2 + $0x62] sm:$0xff]
    %v968 = vld [vmem:[#allocation2 + $0x72] sm:$0xff]
    %v969 = vlaneseq
    %v970 = vshrl.u32 %v969, 7
    %v971 = vsub.s32 2, %v970
    %v972 = vrot.slane %v903, %v971
    %v973 = vmul.f32 %v961, %v972
    %v974 = vmul.f32 %v962, %v972
    %v975 = vmul.f32 %v963, %v972
    %v976 = vmul.f32 %v964, %v972
    %v977 = vmul.f32 %v965, %v972
    %v978 = vmul.f32 %v966, %v972
    %v979 = vmul.f32 %v967, %v972
    %v980 = vmul.f32 %v968, %v972
    %v981 = vadd.f32 %v953, %v973
    %v982 = vadd.f32 %v954, %v974
    %v983 = vadd.f32 %v955, %v975
    %v984 = vadd.f32 %v956, %v976
    %v985 = vadd.f32 %v957, %v977
    %v986 = vadd.f32 %v958, %v978
    %v987 = vadd.f32 %v959, %v979
    %v988 = vadd.f32 %v960, %v980
    %v989 = vld [vmem:[#allocation2 + $0x3] sm:$0xff]
    %v990 = vld [vmem:[#allocation2 + $0x13] sm:$0xff]
    %v991 = vld [vmem:[#allocation2 + $0x23] sm:$0xff]
    %v992 = vld [vmem:[#allocation2 + $0x33] sm:$0xff]
    %v993 = vld [vmem:[#allocation2 + $0x43] sm:$0xff]
    %v994 = vld [vmem:[#allocation2 + $0x53] sm:$0xff]
    %v995 = vld [vmem:[#allocation2 + $0x63] sm:$0xff]
    %v996 = vld [vmem:[#allocation2 + $0x73] sm:$0xff]
    %v997 = vlaneseq
    %v998 = vshrl.u32 %v997, 7
    %v999 = vsub.s32 3, %v998
    %v1000 = vrot.slane %v903, %v999
    %v1001 = vmul.f32 %v989, %v1000
    %v1002 = vmul.f32 %v990, %v1000
    %v1003 = vmul.f32 %v991, %v1000
    %v1004 = vmul.f32 %v992, %v1000
    %v1005 = vmul.f32 %v993, %v1000
    %v1006 = vmul.f32 %v994, %v1000
    %v1007 = vmul.f32 %v995, %v1000
    %v1008 = vmul.f32 %v996, %v1000
    %v1009 = vadd.f32 %v981, %v1001
    %v1010 = vadd.f32 %v982, %v1002
    %v1011 = vadd.f32 %v983, %v1003
    %v1012 = vadd.f32 %v984, %v1004
    %v1013 = vadd.f32 %v985, %v1005
    %v1014 = vadd.f32 %v986, %v1006
    %v1015 = vadd.f32 %v987, %v1007
    %v1016 = vadd.f32 %v988, %v1008
    %v1017 = vld [vmem:[#allocation2 + $0x4] sm:$0xff]
    %v1018 = vld [vmem:[#allocation2 + $0x14] sm:$0xff]
    %v1019 = vld [vmem:[#allocation2 + $0x24] sm:$0xff]
    %v1020 = vld [vmem:[#allocation2 + $0x34] sm:$0xff]
    %v1021 = vld [vmem:[#allocation2 + $0x44] sm:$0xff]
    %v1022 = vld [vmem:[#allocation2 + $0x54] sm:$0xff]
    %v1023 = vld [vmem:[#allocation2 + $0x64] sm:$0xff]
    %v1024 = vld [vmem:[#allocation2 + $0x74] sm:$0xff]
    %v1025 = vlaneseq
    %v1026 = vshrl.u32 %v1025, 7
    %v1027 = vsub.s32 4, %v1026
    %v1028 = vrot.slane %v903, %v1027
    %v1029 = vmul.f32 %v1017, %v1028
    %v1030 = vmul.f32 %v1018, %v1028
    %v1031 = vmul.f32 %v1019, %v1028
    %v1032 = vmul.f32 %v1020, %v1028
    %v1033 = vmul.f32 %v1021, %v1028
    %v1034 = vmul.f32 %v1022, %v1028
    %v1035 = vmul.f32 %v1023, %v1028
    %v1036 = vmul.f32 %v1024, %v1028
    %v1037 = vadd.f32 %v1009, %v1029
    %v1038 = vadd.f32 %v1010, %v1030
    %v1039 = vadd.f32 %v1011, %v1031
    %v1040 = vadd.f32 %v1012, %v1032
    %v1041 = vadd.f32 %v1013, %v1033
    %v1042 = vadd.f32 %v1014, %v1034
    %v1043 = vadd.f32 %v1015, %v1035
    %v1044 = vadd.f32 %v1016, %v1036
    %v1045 = vld [vmem:[#allocation2 + $0x5] sm:$0xff]
    %v1046 = vld [vmem:[#allocation2 + $0x15] sm:$0xff]
    %v1047 = vld [vmem:[#allocation2 + $0x25] sm:$0xff]
    %v1048 = vld [vmem:[#allocation2 + $0x35] sm:$0xff]
    %v1049 = vld [vmem:[#allocation2 + $0x45] sm:$0xff]
    %v1050 = vld [vmem:[#allocation2 + $0x55] sm:$0xff]
    %v1051 = vld [vmem:[#allocation2 + $0x65] sm:$0xff]
    %v1052 = vld [vmem:[#allocation2 + $0x75] sm:$0xff]
    %v1053 = vlaneseq
    %v1054 = vshrl.u32 %v1053, 7
    %v1055 = vsub.s32 5, %v1054
    %v1056 = vrot.slane %v903, %v1055
    %v1057 = vmul.f32 %v1045, %v1056
    %v1058 = vmul.f32 %v1046, %v1056
    %v1059 = vmul.f32 %v1047, %v1056
    %v1060 = vmul.f32 %v1048, %v1056
    %v1061 = vmul.f32 %v1049, %v1056
    %v1062 = vmul.f32 %v1050, %v1056
    %v1063 = vmul.f32 %v1051, %v1056
    %v1064 = vmul.f32 %v1052, %v1056
    %v1065 = vadd.f32 %v1037, %v1057
    %v1066 = vadd.f32 %v1038, %v1058
    %v1067 = vadd.f32 %v1039, %v1059
    %v1068 = vadd.f32 %v1040, %v1060
    %v1069 = vadd.f32 %v1041, %v1061
    %v1070 = vadd.f32 %v1042, %v1062
    %v1071 = vadd.f32 %v1043, %v1063
    %v1072 = vadd.f32 %v1044, %v1064
    %v1073 = vld [vmem:[#allocation2 + $0x6] sm:$0xff]
    %v1074 = vld [vmem:[#allocation2 + $0x16] sm:$0xff]
    %v1075 = vld [vmem:[#allocation2 + $0x26] sm:$0xff]
    %v1076 = vld [vmem:[#allocation2 + $0x36] sm:$0xff]
    %v1077 = vld [vmem:[#allocation2 + $0x46] sm:$0xff]
    %v1078 = vld [vmem:[#allocation2 + $0x56] sm:$0xff]
    %v1079 = vld [vmem:[#allocation2 + $0x66] sm:$0xff]
    %v1080 = vld [vmem:[#allocation2 + $0x76] sm:$0xff]
    %v1081 = vlaneseq
    %v1082 = vshrl.u32 %v1081, 7
    %v1083 = vsub.s32 6, %v1082
    %v1084 = vrot.slane %v903, %v1083
    %v1085 = vmul.f32 %v1073, %v1084
    %v1086 = vmul.f32 %v1074, %v1084
    %v1087 = vmul.f32 %v1075, %v1084
    %v1088 = vmul.f32 %v1076, %v1084
    %v1089 = vmul.f32 %v1077, %v1084
    %v1090 = vmul.f32 %v1078, %v1084
    %v1091 = vmul.f32 %v1079, %v1084
    %v1092 = vmul.f32 %v1080, %v1084
    %v1093 = vadd.f32 %v1065, %v1085
    %v1094 = vadd.f32 %v1066, %v1086
    %v1095 = vadd.f32 %v1067, %v1087
    %v1096 = vadd.f32 %v1068, %v1088
    %v1097 = vadd.f32 %v1069, %v1089
    %v1098 = vadd.f32 %v1070, %v1090
    %v1099 = vadd.f32 %v1071, %v1091
    %v1100 = vadd.f32 %v1072, %v1092
    %v1101 = vld [vmem:[#allocation2 + $0x7] sm:$0xff]
    %v1102 = vld [vmem:[#allocation2 + $0x17] sm:$0xff]
    %v1103 = vld [vmem:[#allocation2 + $0x27] sm:$0xff]
    %v1104 = vld [vmem:[#allocation2 + $0x37] sm:$0xff]
    %v1105 = vld [vmem:[#allocation2 + $0x47] sm:$0xff]
    %v1106 = vld [vmem:[#allocation2 + $0x57] sm:$0xff]
    %v1107 = vld [vmem:[#allocation2 + $0x67] sm:$0xff]
    %v1108 = vld [vmem:[#allocation2 + $0x77] sm:$0xff]
    %v1109 = vlaneseq
    %v1110 = vshrl.u32 %v1109, 7
    %v1111 = vsub.s32 7, %v1110
    %v1112 = vrot.slane %v903, %v1111
    %v1113 = vmul.f32 %v1101, %v1112
    %v1114 = vmul.f32 %v1102, %v1112
    %v1115 = vmul.f32 %v1103, %v1112
    %v1116 = vmul.f32 %v1104, %v1112
    %v1117 = vmul.f32 %v1105, %v1112
    %v1118 = vmul.f32 %v1106, %v1112
    %v1119 = vmul.f32 %v1107, %v1112
    %v1120 = vmul.f32 %v1108, %v1112
    %v1121 = vadd.f32 %v1093, %v1113
    %v1122 = vadd.f32 %v1094, %v1114
    %v1123 = vadd.f32 %v1095, %v1115
    %v1124 = vadd.f32 %v1096, %v1116
    %v1125 = vadd.f32 %v1097, %v1117
    %v1126 = vadd.f32 %v1098, %v1118
    %v1127 = vadd.f32 %v1099, %v1119
    %v1128 = vadd.f32 %v1100, %v1120
    %v1129 = vld [vmem:[#allocation2 + $0x8] sm:$0xff]
    %v1130 = vld [vmem:[#allocation2 + $0x18] sm:$0xff]
    %v1131 = vld [vmem:[#allocation2 + $0x28] sm:$0xff]
    %v1132 = vld [vmem:[#allocation2 + $0x38] sm:$0xff]
    %v1133 = vld [vmem:[#allocation2 + $0x48] sm:$0xff]
    %v1134 = vld [vmem:[#allocation2 + $0x58] sm:$0xff]
    %v1135 = vld [vmem:[#allocation2 + $0x68] sm:$0xff]
    %v1136 = vld [vmem:[#allocation2 + $0x78] sm:$0xff]
    %v1137 = vlaneseq
    %v1138 = vshrl.u32 %v1137, 7
    %v1139 = vsub.s32 0, %v1138
    %v1140 = vrot.slane %v904, %v1139
    %v1141 = vmul.f32 %v1129, %v1140
    %v1142 = vmul.f32 %v1130, %v1140
    %v1143 = vmul.f32 %v1131, %v1140
    %v1144 = vmul.f32 %v1132, %v1140
    %v1145 = vmul.f32 %v1133, %v1140
    %v1146 = vmul.f32 %v1134, %v1140
    %v1147 = vmul.f32 %v1135, %v1140
    %v1148 = vmul.f32 %v1136, %v1140
    %v1149 = vadd.f32 %v1121, %v1141
    %v1150 = vadd.f32 %v1122, %v1142
    %v1151 = vadd.f32 %v1123, %v1143
    %v1152 = vadd.f32 %v1124, %v1144
    %v1153 = vadd.f32 %v1125, %v1145
    %v1154 = vadd.f32 %v1126, %v1146
    %v1155 = vadd.f32 %v1127, %v1147
    %v1156 = vadd.f32 %v1128, %v1148
    %v1157 = vld [vmem:[%s14] sm:$0x1]
    %v1159 = vlaneseq
    %v1160 = vshrl.u32 %v1159, 7
    %v1161 = vsub.s32 0, %v1160
    %v1162 = vrot.slane %v1157, %v1161
    %v1164 = vadd.f32 %v1149, %v1162
    %v1165 = vadd.f32 %v1150, %v1162
    %v1166 = vadd.f32 %v1151, %v1162
    %v1167 = vadd.f32 %v1152, %v1162
    %v1168 = vadd.f32 %v1153, %v1162
    %v1169 = vadd.f32 %v1154, %v1162
    %v1170 = vadd.f32 %v1155, %v1162
    %v1171 = vadd.f32 %v1156, %v1162
    %v1172 = vmax.f32 %v1164, 0.0
    %v1173 = vmax.f32 %v1165, 0.0
    %v1174 = vmax.f32 %v1166, 0.0
    %v1175 = vmax.f32 %v1167, 0.0
    %v1176 = vmax.f32 %v1168, 0.0
    %v1177 = vmax.f32 %v1169, 0.0
    %v1178 = vmax.f32 %v1170, 0.0
    %v1179 = vmax.f32 %v1171, 0.0
    %v1180 = vld [vmem:[%s15] sm:$0xff]
    %v1181 = vld [vmem:[%s15 + $0x8] sm:$0xff]
    %v1182 = vld [vmem:[%s15 + $0x10] sm:$0xff]
    %v1183 = vld [vmem:[%s15 + $0x18] sm:$0xff]
    %v1184 = vld [vmem:[%s16] sm:$0x1]
    %v1186 = vlaneseq
    %v1187 = vshrl.u32 %v1186, 7
    %v1188 = vsub.s32 0, %v1187
    %v1189 = vrot.slane %v1184, %v1188
    %v1192 = vsel %vm212, %v1172, 0
    %v1195 = vsel %vm212, %v1173, 0
    %v1198 = vsel %vm212, %v1174, 0
    %v1201 = vsel %vm212, %v1175, 0
    %v1204 = vsel %vm212, %v1176, 0
    %v1207 = vsel %vm212, %v1177, 0
    %v1210 = vsel %vm212, %v1178, 0
    %v1213 = vsel %vm212, %v1179, 0
    %1215 = vmatprep.subr.mxu0 0.0
    %1216 = vmatpush1.msra.mxu0 %v1180
    %1217 = vmatprep.subr.mxu0 0.0
    %1218 = vmatpush1.msra.mxu0 %v1181
    %1219 = vmatprep.subr.mxu0 0.0
    %1220 = vmatpush1.msra.mxu0 %v1182
    %1221 = vmatprep.subr.mxu0 0.0
    %1222 = vmatpush1.msra.mxu0 %v1183
    %1223 = vmatprep.subr.mxu0 0.0
    %1224 = vmatpush1.msra.mxu0 0.0
    %1225 = vmatprep.subr.mxu0 0.0
    %1226 = vmatpush1.msra.mxu0 0.0
    %1227 = vmatprep.subr.mxu0 0.0
    %1228 = vmatpush1.msra.mxu0 0.0
    %1229 = vmatprep.subr.mxu0 0.0
    %1230 = vmatpush1.msra.mxu0 0.0
    %1231 = vmatprep.subr.mxu0 0.0
    %1232 = vmatpush1.msra.mxu0 0.0
    %1233 = vmatprep.subr.mxu0 0.0
    %1234 = vmatpush1.msra.mxu0 0.0
    %1235 = vmatprep.subr.mxu0 0.0
    %1236 = vmatpush1.msra.mxu0 0.0
    %1237 = vmatprep.subr.mxu0 0.0
    %1238 = vmatpush1.msra.mxu0 0.0
    %1239 = vmatprep.subr.mxu0 0.0
    %1240 = vmatpush1.msra.mxu0 0.0
    %1241 = vmatprep.subr.mxu0 0.0
    %1242 = vmatpush1.msra.mxu0 0.0
    %1243 = vmatprep.subr.mxu0 0.0
    %1244 = vmatpush1.msra.mxu0 0.0
    %1245 = vmatprep.subr.mxu0 0.0
    %1246 = vmatpush1.msra.mxu0 0.0
    %1247 = vmatprep.subr.mxu0 0.0
    %1248 = vmatpush1.msra.mxu0 0.0
    %1249 = vmatprep.subr.mxu0 0.0
    %1250 = vmatpush1.msra.mxu0 0.0
    %1251 = vmatprep.subr.mxu0 0.0
    %1252 = vmatpush1.msra.mxu0 0.0
    %1253 = vmatprep.subr.mxu0 0.0
    %1254 = vmatpush1.msra.mxu0 0.0
    %1255 = vmatprep.subr.mxu0 0.0
    %1256 = vmatpush1.msra.mxu0 0.0
    %1257 = vmatprep.subr.mxu0 0.0
    %1258 = vmatpush1.msra.mxu0 0.0
    %1259 = vmatprep.subr.mxu0 0.0
    %1260 = vmatpush1.msra.mxu0 0.0
    %1261 = vmatprep.subr.mxu0 0.0
    %1262 = vmatpush1.msra.mxu0 0.0
    %1263 = vmatprep.subr.mxu0 0.0
    %1264 = vmatpush1.msra.mxu0 0.0
    %1265 = vmatprep.subr.mxu0 0.0
    %1266 = vmatpush1.msra.mxu0 0.0
    %1267 = vmatprep.subr.mxu0 0.0
    %1268 = vmatpush1.msra.mxu0 0.0
    %1269 = vmatprep.subr.mxu0 0.0
    %1270 = vmatpush1.msra.mxu0 0.0
    %1271 = vmatprep.subr.mxu0 0.0
    %1272 = vmatpush1.msra.mxu0 0.0
    %1273 = vmatprep.subr.mxu0 0.0
    %1274 = vmatpush1.msra.mxu0 0.0
    %1275 = vmatprep.subr.mxu0 0.0
    %1276 = vmatpush1.msra.mxu0 0.0
    %1277 = vmatprep.subr.mxu0 0.0
    %1278 = vmatpush1.msra.mxu0 0.0
    %1279 = vmatprep.mubr.f32.mxu0 0.0
    %1280 = vmatmul.mubr.f32.gmra.mrb[0].mxu0 %v1192
    %v1281 = vpop.f32.mrb[0].mxu0
    %v1282 = vadd.f32 %v1189, %v1281
    %v1283 = vpop.f32.mrb[0].mxu0
    %1284 = vmatprep.mubr.f32.mxu0 0.0
    %1285 = vmatmul.mubr.f32.gmra.mrb[0].mxu0 %v1195
    %v1286 = vpop.f32.mrb[0].mxu0
    %v1287 = vadd.f32 %v1189, %v1286
    %v1288 = vpop.f32.mrb[0].mxu0
    %1289 = vmatprep.mubr.f32.mxu0 0.0
    %1290 = vmatmul.mubr.f32.gmra.mrb[0].mxu0 %v1198
    %v1291 = vpop.f32.mrb[0].mxu0
    %v1292 = vadd.f32 %v1189, %v1291
    %v1293 = vpop.f32.mrb[0].mxu0
    %1294 = vmatprep.mubr.f32.mxu0 0.0
    %1295 = vmatmul.mubr.f32.gmra.mrb[0].mxu0 %v1201
    %v1296 = vpop.f32.mrb[0].mxu0
    %v1297 = vadd.f32 %v1189, %v1296
    %v1298 = vpop.f32.mrb[0].mxu0
    %1299 = vmatprep.mubr.f32.mxu0 0.0
    %1300 = vmatmul.mubr.f32.gmra.mrb[0].mxu0 %v1204
    %v1301 = vpop.f32.mrb[0].mxu0
    %v1302 = vadd.f32 %v1189, %v1301
    %v1303 = vpop.f32.mrb[0].mxu0
    %1304 = vmatprep.mubr.f32.mxu0 0.0
    %1305 = vmatmul.mubr.f32.gmra.mrb[0].mxu0 %v1207
    %v1306 = vpop.f32.mrb[0].mxu0
    %v1307 = vadd.f32 %v1189, %v1306
    %v1308 = vpop.f32.mrb[0].mxu0
    %1309 = vmatprep.mubr.f32.mxu0 0.0
    %1310 = vmatmul.mubr.f32.gmra.mrb[0].mxu0 %v1210
    %v1311 = vpop.f32.mrb[0].mxu0
    %v1312 = vadd.f32 %v1189, %v1311
    %v1313 = vpop.f32.mrb[0].mxu0
    %1314 = vmatprep.mubr.f32.mxu0 0.0
    %1315 = vmatmul.mubr.f32.gmra.mrb[0].mxu0 %v1213
    %v1316 = vpop.f32.mrb[0].mxu0
    %v1317 = vadd.f32 %v1189, %v1316
    %v1318 = vpop.f32.mrb[0].mxu0
    %1319 = vdwg.mxu0
    %v1320 = vmax.f32 %v1282, 0.0
    %v1321 = vmax.f32 %v1287, 0.0
    %v1322 = vmax.f32 %v1292, 0.0
    %v1323 = vmax.f32 %v1297, 0.0
    %v1324 = vmax.f32 %v1302, 0.0
    %v1325 = vmax.f32 %v1307, 0.0
    %v1326 = vmax.f32 %v1312, 0.0
    %v1327 = vmax.f32 %v1317, 0.0
    %v1328 = vlaneseq
    %v1329 = vshrl.u32 %v1328, 7
    %v1330 = vadd.s32 %v1329, 8
    %v1331 = vadd.s32 %v1329, 16
    %v1332 = vadd.s32 %v1329, 24
    %v1333 = vld [vmem:[%s4] sm:$0x1]
    %v1334 = vlaneseq
    %v1335 = vshrl.u32 %v1334, 7
    %v1336 = vsub.s32 0, %v1335
    %v1337 = vrot.slane %v1333, %v1336
    %vm1338 = vcmp.eq.s32.totalorder %v1329, %v1337
    %vm1339 = vcmp.eq.s32.totalorder %v1330, %v1337
    %vm1340 = vcmp.eq.s32.totalorder %v1331, %v1337
    %vm1341 = vcmp.eq.s32.totalorder %v1332, %v1337
    %v1342 = vsel %vm1338, 1, 0
    %v1343 = vsel %vm1339, 1, 0
    %v1344 = vsel %vm1340, 1, 0
    %v1345 = vsel %vm1341, 1, 0
    %v1346 = vcvt.s32.f32 %v1342
    %v1347 = vcvt.s32.f32 %v1343
    %v1348 = vcvt.s32.f32 %v1344
    %v1349 = vcvt.s32.f32 %v1345
    %vm1350 = vcmask 523264
    %v1352 = vsel %vm1350, %v1346, 0
    %v1355 = vsel %vm1350, %v1347, 0
    %v1358 = vsel %vm1350, %v1348, 0
    %v1361 = vsel %vm1350, %v1349, 0
    %1363 = vmatprep.subr.mxu0 0.0
    %1364 = vmatpush1.msra.mxu0 %v1320
    %1365 = vmatprep.subr.mxu0 0.0
    %1366 = vmatpush1.msra.mxu0 %v1321
    %1367 = vmatprep.subr.mxu0 0.0
    %1368 = vmatpush1.msra.mxu0 %v1322
    %1369 = vmatprep.subr.mxu0 0.0
    %1370 = vmatpush1.msra.mxu0 %v1323
    %1371 = vmatprep.subr.mxu0 0.0
    %1372 = vmatpush1.msra.mxu0 %v1324
    %1373 = vmatprep.subr.mxu0 0.0
    %1374 = vmatpush1.msra.mxu0 %v1325
    %1375 = vmatprep.subr.mxu0 0.0
    %1376 = vmatpush1.msra.mxu0 %v1326
    %1377 = vmatprep.subr.mxu0 0.0
    %1378 = vmatpush1.msra.mxu0 %v1327
    %1379 = vmatprep.subr.mxu0 0.0
    %1380 = vmatpush1.msra.mxu0 0.0
    %1381 = vmatprep.subr.mxu0 0.0
    %1382 = vmatpush1.msra.mxu0 0.0
    %1383 = vmatprep.subr.mxu0 0.0
    %1384 = vmatpush1.msra.mxu0 0.0
    %1385 = vmatprep.subr.mxu0 0.0
    %1386 = vmatpush1.msra.mxu0 0.0
    %1387 = vmatprep.subr.mxu0 0.0
    %1388 = vmatpush1.msra.mxu0 0.0
    %1389 = vmatprep.subr.mxu0 0.0
    %1390 = vmatpush1.msra.mxu0 0.0
    %1391 = vmatprep.subr.mxu0 0.0
    %1392 = vmatpush1.msra.mxu0 0.0
    %1393 = vmatprep.subr.mxu0 0.0
    %1394 = vmatpush1.msra.mxu0 0.0
    %1395 = vmatprep.subr.mxu0 0.0
    %1396 = vmatpush1.msra.mxu0 0.0
    %1397 = vmatprep.subr.mxu0 0.0
    %1398 = vmatpush1.msra.mxu0 0.0
    %1399 = vmatprep.subr.mxu0 0.0
    %1400 = vmatpush1.msra.mxu0 0.0
    %1401 = vmatprep.subr.mxu0 0.0
    %1402 = vmatpush1.msra.mxu0 0.0
    %1403 = vmatprep.subr.mxu0 0.0
    %1404 = vmatpush1.msra.mxu0 0.0
    %1405 = vmatprep.subr.mxu0 0.0
    %1406 = vmatpush1.msra.mxu0 0.0
    %1407 = vmatprep.subr.mxu0 0.0
    %1408 = vmatpush1.msra.mxu0 0.0
    %1409 = vmatprep.subr.mxu0 0.0
    %1410 = vmatpush1.msra.mxu0 0.0
    %1411 = vmatprep.subr.mxu0 0.0
    %1412 = vmatpush1.msra.mxu0 0.0
    %1413 = vmatprep.subr.mxu0 0.0
    %1414 = vmatpush1.msra.mxu0 0.0
    %1415 = vmatprep.subr.mxu0 0.0
    %1416 = vmatpush1.msra.mxu0 0.0
    %1417 = vmatprep.subr.mxu0 0.0
    %1418 = vmatpush1.msra.mxu0 0.0
    %1419 = vmatprep.subr.mxu0 0.0
    %1420 = vmatpush1.msra.mxu0 0.0
    %1421 = vmatprep.subr.mxu0 0.0
    %1422 = vmatpush1.msra.mxu0 0.0
    %1423 = vmatprep.subr.mxu0 0.0
    %1424 = vmatpush1.msra.mxu0 0.0
    %1425 = vmatprep.subr.mxu0 0.0
    %1426 = vmatpush1.msra.mxu0 0.0
    %1427 = vmatprep.mubr.f32.mxu0 0.0
    %1428 = vmatmul.mubr.f32.gmra.mrb[0].mxu0 %v1352
    %v1429 = vpop.f32.mrb[0].mxu0
    %v1430 = vadd.f32 0.0, %v1429
    %v1431 = vpop.f32.mrb[0].mxu0
    %1432 = vmatprep.mubr.f32.mxu0 0.0
    %1433 = vmatmul.mubr.f32.gmra.mrb[0].mxu0 %v1355
    %v1434 = vpop.f32.mrb[0].mxu0
    %v1435 = vadd.f32 0.0, %v1434
    %v1436 = vpop.f32.mrb[0].mxu0
    %1437 = vmatprep.mubr.f32.mxu0 0.0
    %1438 = vmatmul.mubr.f32.gmra.mrb[0].mxu0 %v1358
    %v1439 = vpop.f32.mrb[0].mxu0
    %v1440 = vadd.f32 0.0, %v1439
    %v1441 = vpop.f32.mrb[0].mxu0
    %1442 = vmatprep.mubr.f32.mxu0 0.0
    %1443 = vmatmul.mubr.f32.gmra.mrb[0].mxu0 %v1361
    %v1444 = vpop.f32.mrb[0].mxu0
    %v1445 = vadd.f32 0.0, %v1444
    %v1446 = vpop.f32.mrb[0].mxu0
    %1447 = vdwg.mxu0
    %v1448 = vsel %vm1350, %v1346, 0.0
    %1449 = vadd.xlane.f32.xlu0 %v1448
    %v1450 = vpop.xlane.xlu0 %1449
    %v1451 = vsel %vm1350, %v1347, 0.0
    %1452 = vadd.xlane.f32.xlu0 %v1451
    %v1453 = vpop.xlane.xlu0 %1452
    %v1454 = vsel %vm1350, %v1348, 0.0
    %1455 = vadd.xlane.f32.xlu0 %v1454
    %v1456 = vpop.xlane.xlu0 %1455
    %v1457 = vsel %vm1350, %v1349, 0.0
    %1458 = vadd.xlane.f32.xlu0 %v1457
    %v1459 = vpop.xlane.xlu0 %1458
    %v1460 = vmax.f32 %v1450, 1.0
    %v1461 = vmax.f32 %v1453, 1.0
    %v1462 = vmax.f32 %v1456, 1.0
    %v1463 = vmax.f32 %v1459, 1.0
    %v1464 = vrcp.pop %v1460
    %v1465 = vrcp.pop %v1461
    %v1466 = vrcp.pop %v1462
    %v1467 = vrcp.pop %v1463
    %v1468 = vmul.f32 %v1460, %v1464
    %v1469 = vmul.f32 %v1461, %v1465
    %v1470 = vmul.f32 %v1462, %v1466
    %v1471 = vmul.f32 %v1463, %v1467
    %v1472 = vsub.f32 2.0, %v1468
    %v1473 = vsub.f32 2.0, %v1469
    %v1474 = vsub.f32 2.0, %v1470
    %v1475 = vsub.f32 2.0, %v1471
    %v1476 = vmul.f32 %v1464, %v1472
    %v1477 = vmul.f32 %v1465, %v1473
    %v1478 = vmul.f32 %v1466, %v1474
    %v1479 = vmul.f32 %v1467, %v1475
    %v1480 = vmul.f32 %v1430, %v1476
    %v1481 = vmul.f32 %v1435, %v1477
    %v1482 = vmul.f32 %v1440, %v1478
    %v1483 = vmul.f32 %v1445, %v1479
    %v1484 = vadd.s32 %v1329, 32
    %v1485 = vld [vmem:[%s6] sm:$0x1]
    %v1486 = vlaneseq
    %v1487 = vshrl.u32 %v1486, 7
    %v1488 = vsub.s32 0, %v1487
    %v1489 = vrot.slane %v1485, %v1488
    %vm1490 = vcmp.eq.s32.totalorder %v1329, %v1489
    %vm1491 = vcmp.eq.s32.totalorder %v1330, %v1489
    %vm1492 = vcmp.eq.s32.totalorder %v1331, %v1489
    %vm1493 = vcmp.eq.s32.totalorder %v1332, %v1489
    %vm1494 = vcmp.eq.s32.totalorder %v1484, %v1489
    %v1495 = vsel %vm1490, 1, 0
    %v1496 = vsel %vm1491, 1, 0
    %v1497 = vsel %vm1492, 1, 0
    %v1498 = vsel %vm1493, 1, 0
    %v1499 = vsel %vm1494, 1, 0
    %v1500 = vcvt.s32.f32 %v1495
    %v1501 = vcvt.s32.f32 %v1496
    %v1502 = vcvt.s32.f32 %v1497
    %v1503 = vcvt.s32.f32 %v1498
    %v1504 = vcvt.s32.f32 %v1499
    %v1505 = vld [vmem:[%s7] sm:$0x1]
    %v1507 = vlaneseq
    %v1508 = vshrl.u32 %v1507, 7
    %v1509 = vsub.s32 0, %v1508
    %v1510 = vrot.slane %v1505, %v1509
    %v1512 = vmul.f32 %v1500, %v1510
    %v1513 = vmul.f32 %v1501, %v1510
    %v1514 = vmul.f32 %v1502, %v1510
    %v1515 = vmul.f32 %v1503, %v1510
    %v1516 = vmul.f32 %v1504, %v1510
    %v1518 = vsel %vm1350, %v1512, 0
    %v1521 = vsel %vm1350, %v1513, 0
    %v1524 = vsel %vm1350, %v1514, 0
    %v1527 = vsel %vm1350, %v1515, 0
    %v1530 = vsel %vm1350, %v1516, 0
    %1532 = vmatprep.subr.mxu0 0.0
    %1533 = vmatpush1.msra.mxu0 %v1320
    %1534 = vmatprep.subr.mxu0 0.0
    %1535 = vmatpush1.msra.mxu0 %v1321
    %1536 = vmatprep.subr.mxu0 0.0
    %1537 = vmatpush1.msra.mxu0 %v1322
    %1538 = vmatprep.subr.mxu0 0.0
    %1539 = vmatpush1.msra.mxu0 %v1323
    %1540 = vmatprep.subr.mxu0 0.0
    %1541 = vmatpush1.msra.mxu0 %v1324
    %1542 = vmatprep.subr.mxu0 0.0
    %1543 = vmatpush1.msra.mxu0 %v1325
    %1544 = vmatprep.subr.mxu0 0.0
    %1545 = vmatpush1.msra.mxu0 %v1326
    %1546 = vmatprep.subr.mxu0 0.0
    %1547 = vmatpush1.msra.mxu0 %v1327
    %1548 = vmatprep.subr.mxu0 0.0
    %1549 = vmatpush1.msra.mxu0 0.0
    %1550 = vmatprep.subr.mxu0 0.0
    %1551 = vmatpush1.msra.mxu0 0.0
    %1552 = vmatprep.subr.mxu0 0.0
    %1553 = vmatpush1.msra.mxu0 0.0
    %1554 = vmatprep.subr.mxu0 0.0
    %1555 = vmatpush1.msra.mxu0 0.0
    %1556 = vmatprep.subr.mxu0 0.0
    %1557 = vmatpush1.msra.mxu0 0.0
    %1558 = vmatprep.subr.mxu0 0.0
    %1559 = vmatpush1.msra.mxu0 0.0
    %1560 = vmatprep.subr.mxu0 0.0
    %1561 = vmatpush1.msra.mxu0 0.0
    %1562 = vmatprep.subr.mxu0 0.0
    %1563 = vmatpush1.msra.mxu0 0.0
    %1564 = vmatprep.subr.mxu0 0.0
    %1565 = vmatpush1.msra.mxu0 0.0
    %1566 = vmatprep.subr.mxu0 0.0
    %1567 = vmatpush1.msra.mxu0 0.0
    %1568 = vmatprep.subr.mxu0 0.0
    %1569 = vmatpush1.msra.mxu0 0.0
    %1570 = vmatprep.subr.mxu0 0.0
    %1571 = vmatpush1.msra.mxu0 0.0
    %1572 = vmatprep.subr.mxu0 0.0
    %1573 = vmatpush1.msra.mxu0 0.0
    %1574 = vmatprep.subr.mxu0 0.0
    %1575 = vmatpush1.msra.mxu0 0.0
    %1576 = vmatprep.subr.mxu0 0.0
    %1577 = vmatpush1.msra.mxu0 0.0
    %1578 = vmatprep.subr.mxu0 0.0
    %1579 = vmatpush1.msra.mxu0 0.0
    %1580 = vmatprep.subr.mxu0 0.0
    %1581 = vmatpush1.msra.mxu0 0.0
    %1582 = vmatprep.subr.mxu0 0.0
    %1583 = vmatpush1.msra.mxu0 0.0
    %1584 = vmatprep.subr.mxu0 0.0
    %1585 = vmatpush1.msra.mxu0 0.0
    %1586 = vmatprep.subr.mxu0 0.0
    %1587 = vmatpush1.msra.mxu0 0.0
    %1588 = vmatprep.subr.mxu0 0.0
    %1589 = vmatpush1.msra.mxu0 0.0
    %1590 = vmatprep.subr.mxu0 0.0
    %1591 = vmatpush1.msra.mxu0 0.0
    %1592 = vmatprep.subr.mxu0 0.0
    %1593 = vmatpush1.msra.mxu0 0.0
    %1594 = vmatprep.subr.mxu0 0.0
    %1595 = vmatpush1.msra.mxu0 0.0
    %1596 = vmatprep.mubr.f32.mxu0 0.0
    %1597 = vmatmul.mubr.f32.gmra.mrb[0].mxu0 %v1518
    %v1598 = vpop.f32.mrb[0].mxu0
    %v1599 = vadd.f32 0.0, %v1598
    %v1600 = vpop.f32.mrb[0].mxu0
    %1601 = vmatprep.mubr.f32.mxu0 0.0
    %1602 = vmatmul.mubr.f32.gmra.mrb[0].mxu0 %v1521
    %v1603 = vpop.f32.mrb[0].mxu0
    %v1604 = vadd.f32 0.0, %v1603
    %v1605 = vpop.f32.mrb[0].mxu0
    %1606 = vmatprep.mubr.f32.mxu0 0.0
    %1607 = vmatmul.mubr.f32.gmra.mrb[0].mxu0 %v1524
    %v1608 = vpop.f32.mrb[0].mxu0
    %v1609 = vadd.f32 0.0, %v1608
    %v1610 = vpop.f32.mrb[0].mxu0
    %1611 = vmatprep.mubr.f32.mxu0 0.0
    %1612 = vmatmul.mubr.f32.gmra.mrb[0].mxu0 %v1527
    %v1613 = vpop.f32.mrb[0].mxu0
    %v1614 = vadd.f32 0.0, %v1613
    %v1615 = vpop.f32.mrb[0].mxu0
    %1616 = vmatprep.mubr.f32.mxu0 0.0
    %1617 = vmatmul.mubr.f32.gmra.mrb[0].mxu0 %v1530
    %v1618 = vpop.f32.mrb[0].mxu0
    %v1619 = vadd.f32 0.0, %v1618
    %v1620 = vpop.f32.mrb[0].mxu0
    %1621 = vdwg.mxu0
    %v1622 = vsel %vm1350, %v1512, 0.0
    %1623 = vadd.xlane.f32.xlu0 %v1622
    %v1624 = vpop.xlane.xlu0 %1623
    %v1625 = vsel %vm1350, %v1513, 0.0
    %1626 = vadd.xlane.f32.xlu0 %v1625
    %v1627 = vpop.xlane.xlu0 %1626
    %v1628 = vsel %vm1350, %v1514, 0.0
    %1629 = vadd.xlane.f32.xlu0 %v1628
    %v1630 = vpop.xlane.xlu0 %1629
    %v1631 = vsel %vm1350, %v1515, 0.0
    %1632 = vadd.xlane.f32.xlu0 %v1631
    %v1633 = vpop.xlane.xlu0 %1632
    %v1634 = vsel %vm1350, %v1516, 0.0
    %1635 = vadd.xlane.f32.xlu0 %v1634
    %v1636 = vpop.xlane.xlu0 %1635
    %v1637 = vmax.f32 %v1624, 1.0
    %v1638 = vmax.f32 %v1627, 1.0
    %v1639 = vmax.f32 %v1630, 1.0
    %v1640 = vmax.f32 %v1633, 1.0
    %v1641 = vmax.f32 %v1636, 1.0
    %v1642 = vrcp.pop %v1637
    %v1643 = vrcp.pop %v1638
    %v1644 = vrcp.pop %v1639
    %v1645 = vrcp.pop %v1640
    %v1646 = vrcp.pop %v1641
    %v1647 = vmul.f32 %v1637, %v1642
    %v1648 = vmul.f32 %v1638, %v1643
    %v1649 = vmul.f32 %v1639, %v1644
    %v1650 = vmul.f32 %v1640, %v1645
    %v1651 = vmul.f32 %v1641, %v1646
    %v1652 = vsub.f32 2.0, %v1647
    %v1653 = vsub.f32 2.0, %v1648
    %v1654 = vsub.f32 2.0, %v1649
    %v1655 = vsub.f32 2.0, %v1650
    %v1656 = vsub.f32 2.0, %v1651
    %v1657 = vmul.f32 %v1642, %v1652
    %v1658 = vmul.f32 %v1643, %v1653
    %v1659 = vmul.f32 %v1644, %v1654
    %v1660 = vmul.f32 %v1645, %v1655
    %v1661 = vmul.f32 %v1646, %v1656
    %v1662 = vmul.f32 %v1599, %v1657
    %v1663 = vmul.f32 %v1604, %v1658
    %v1664 = vmul.f32 %v1609, %v1659
    %v1665 = vmul.f32 %v1614, %v1660
    %v1666 = vmul.f32 %v1619, %v1661
    %v1667 = vld [vmem:[%s17] sm:$0xff]
    %v1668 = vld [vmem:[%s17 + $0x8] sm:$0xff]
    %v1669 = vld [vmem:[%s17 + $0x10] sm:$0xff]
    %v1670 = vld [vmem:[%s17 + $0x18] sm:$0xff]
    %v1671 = vld [vmem:[%s18] sm:$0x1]
    %v1673 = vlaneseq
    %v1674 = vshrl.u32 %v1673, 7
    %v1675 = vsub.s32 0, %v1674
    %v1676 = vrot.slane %v1671, %v1675
    %v1679 = vsel %vm212, %v1480, 0
    %v1682 = vsel %vm212, %v1481, 0
    %v1685 = vsel %vm212, %v1482, 0
    %v1688 = vsel %vm212, %v1483, 0
    %1690 = vmatprep.subr.mxu0 0.0
    %1691 = vmatpush1.msra.mxu0 %v1667
    %1692 = vmatprep.subr.mxu0 0.0
    %1693 = vmatpush1.msra.mxu0 %v1668
    %1694 = vmatprep.subr.mxu0 0.0
    %1695 = vmatpush1.msra.mxu0 %v1669
    %1696 = vmatprep.subr.mxu0 0.0
    %1697 = vmatpush1.msra.mxu0 %v1670
    %1698 = vmatprep.subr.mxu0 0.0
    %1699 = vmatpush1.msra.mxu0 0.0
    %1700 = vmatprep.subr.mxu0 0.0
    %1701 = vmatpush1.msra.mxu0 0.0
    %1702 = vmatprep.subr.mxu0 0.0
    %1703 = vmatpush1.msra.mxu0 0.0
    %1704 = vmatprep.subr.mxu0 0.0
    %1705 = vmatpush1.msra.mxu0 0.0
    %1706 = vmatprep.subr.mxu0 0.0
    %1707 = vmatpush1.msra.mxu0 0.0
    %1708 = vmatprep.subr.mxu0 0.0
    %1709 = vmatpush1.msra.mxu0 0.0
    %1710 = vmatprep.subr.mxu0 0.0
    %1711 = vmatpush1.msra.mxu0 0.0
    %1712 = vmatprep.subr.mxu0 0.0
    %1713 = vmatpush1.msra.mxu0 0.0
    %1714 = vmatprep.subr.mxu0 0.0
    %1715 = vmatpush1.msra.mxu0 0.0
    %1716 = vmatprep.subr.mxu0 0.0
    %1717 = vmatpush1.msra.mxu0 0.0
    %1718 = vmatprep.subr.mxu0 0.0
    %1719 = vmatpush1.msra.mxu0 0.0
    %1720 = vmatprep.subr.mxu0 0.0
    %1721 = vmatpush1.msra.mxu0 0.0
    %1722 = vmatprep.subr.mxu0 0.0
    %1723 = vmatpush1.msra.mxu0 0.0
    %1724 = vmatprep.subr.mxu0 0.0
    %1725 = vmatpush1.msra.mxu0 0.0
    %1726 = vmatprep.subr.mxu0 0.0
    %1727 = vmatpush1.msra.mxu0 0.0
    %1728 = vmatprep.subr.mxu0 0.0
    %1729 = vmatpush1.msra.mxu0 0.0
    %1730 = vmatprep.subr.mxu0 0.0
    %1731 = vmatpush1.msra.mxu0 0.0
    %1732 = vmatprep.subr.mxu0 0.0
    %1733 = vmatpush1.msra.mxu0 0.0
    %1734 = vmatprep.subr.mxu0 0.0
    %1735 = vmatpush1.msra.mxu0 0.0
    %1736 = vmatprep.subr.mxu0 0.0
    %1737 = vmatpush1.msra.mxu0 0.0
    %1738 = vmatprep.subr.mxu0 0.0
    %1739 = vmatpush1.msra.mxu0 0.0
    %1740 = vmatprep.subr.mxu0 0.0
    %1741 = vmatpush1.msra.mxu0 0.0
    %1742 = vmatprep.subr.mxu0 0.0
    %1743 = vmatpush1.msra.mxu0 0.0
    %1744 = vmatprep.subr.mxu0 0.0
    %1745 = vmatpush1.msra.mxu0 0.0
    %1746 = vmatprep.subr.mxu0 0.0
    %1747 = vmatpush1.msra.mxu0 0.0
    %1748 = vmatprep.subr.mxu0 0.0
    %1749 = vmatpush1.msra.mxu0 0.0
    %1750 = vmatprep.subr.mxu0 0.0
    %1751 = vmatpush1.msra.mxu0 0.0
    %1752 = vmatprep.subr.mxu0 0.0
    %1753 = vmatpush1.msra.mxu0 0.0
    %1754 = vmatprep.mubr.f32.mxu0 0.0
    %1755 = vmatmul.mubr.f32.gmra.mrb[0].mxu0 %v1679
    %v1756 = vpop.f32.mrb[0].mxu0
    %v1757 = vadd.f32 %v1676, %v1756
    %v1758 = vpop.f32.mrb[0].mxu0
    %1759 = vmatprep.mubr.f32.mxu0 0.0
    %1760 = vmatmul.mubr.f32.gmra.mrb[0].mxu0 %v1682
    %v1761 = vpop.f32.mrb[0].mxu0
    %v1762 = vadd.f32 %v1676, %v1761
    %v1763 = vpop.f32.mrb[0].mxu0
    %1764 = vmatprep.mubr.f32.mxu0 0.0
    %1765 = vmatmul.mubr.f32.gmra.mrb[0].mxu0 %v1685
    %v1766 = vpop.f32.mrb[0].mxu0
    %v1767 = vadd.f32 %v1676, %v1766
    %v1768 = vpop.f32.mrb[0].mxu0
    %1769 = vmatprep.mubr.f32.mxu0 0.0
    %1770 = vmatmul.mubr.f32.gmra.mrb[0].mxu0 %v1688
    %v1771 = vpop.f32.mrb[0].mxu0
    %v1772 = vadd.f32 %v1676, %v1771
    %v1773 = vpop.f32.mrb[0].mxu0
    %1774 = vdwg.mxu0
    %v1775 = vmax.f32 %v1757, 0.0
    %v1776 = vmax.f32 %v1762, 0.0
    %v1777 = vmax.f32 %v1767, 0.0
    %v1778 = vmax.f32 %v1772, 0.0
    %v1779 = vld [vmem:[%s0] sm:$0xff]
    %v1780 = vld [vmem:[%s0 + $0x8] sm:$0xff]
    %v1781 = vld [vmem:[%s0 + $0x10] sm:$0xff]
    %v1782 = vld [vmem:[%s0 + $0x18] sm:$0xff]
    %v1783 = vld [vmem:[%s19] sm:$0xff]
    %v1784 = vld [vmem:[%s19 + $0x8] sm:$0xff]
    %v1785 = vld [vmem:[%s19 + $0x10] sm:$0xff]
    %v1786 = vld [vmem:[%s19 + $0x18] sm:$0xff]
    %v1788 = vsel %vm212, %v1775, 0
    %v1791 = vsel %vm212, %v1776, 0
    %v1794 = vsel %vm212, %v1777, 0
    %v1797 = vsel %vm212, %v1778, 0
    %1799 = vmatprep.subr.mxu0 0.0
    %1800 = vmatpush1.msra.mxu0 %v1783
    %1801 = vmatprep.subr.mxu0 0.0
    %1802 = vmatpush1.msra.mxu0 %v1784
    %1803 = vmatprep.subr.mxu0 0.0
    %1804 = vmatpush1.msra.mxu0 %v1785
    %1805 = vmatprep.subr.mxu0 0.0
    %1806 = vmatpush1.msra.mxu0 %v1786
    %1807 = vmatprep.subr.mxu0 0.0
    %1808 = vmatpush1.msra.mxu0 0.0
    %1809 = vmatprep.subr.mxu0 0.0
    %1810 = vmatpush1.msra.mxu0 0.0
    %1811 = vmatprep.subr.mxu0 0.0
    %1812 = vmatpush1.msra.mxu0 0.0
    %1813 = vmatprep.subr.mxu0 0.0
    %1814 = vmatpush1.msra.mxu0 0.0
    %1815 = vmatprep.subr.mxu0 0.0
    %1816 = vmatpush1.msra.mxu0 0.0
    %1817 = vmatprep.subr.mxu0 0.0
    %1818 = vmatpush1.msra.mxu0 0.0
    %1819 = vmatprep.subr.mxu0 0.0
    %1820 = vmatpush1.msra.mxu0 0.0
    %1821 = vmatprep.subr.mxu0 0.0
    %1822 = vmatpush1.msra.mxu0 0.0
    %1823 = vmatprep.subr.mxu0 0.0
    %1824 = vmatpush1.msra.mxu0 0.0
    %1825 = vmatprep.subr.mxu0 0.0
    %1826 = vmatpush1.msra.mxu0 0.0
    %1827 = vmatprep.subr.mxu0 0.0
    %1828 = vmatpush1.msra.mxu0 0.0
    %1829 = vmatprep.subr.mxu0 0.0
    %1830 = vmatpush1.msra.mxu0 0.0
    %1831 = vmatprep.subr.mxu0 0.0
    %1832 = vmatpush1.msra.mxu0 0.0
    %1833 = vmatprep.subr.mxu0 0.0
    %1834 = vmatpush1.msra.mxu0 0.0
    %1835 = vmatprep.subr.mxu0 0.0
    %1836 = vmatpush1.msra.mxu0 0.0
    %1837 = vmatprep.subr.mxu0 0.0
    %1838 = vmatpush1.msra.mxu0 0.0
    %1839 = vmatprep.subr.mxu0 0.0
    %1840 = vmatpush1.msra.mxu0 0.0
    %1841 = vmatprep.subr.mxu0 0.0
    %1842 = vmatpush1.msra.mxu0 0.0
    %1843 = vmatprep.subr.mxu0 0.0
    %1844 = vmatpush1.msra.mxu0 0.0
    %1845 = vmatprep.subr.mxu0 0.0
    %1846 = vmatpush1.msra.mxu0 0.0
    %1847 = vmatprep.subr.mxu0 0.0
    %1848 = vmatpush1.msra.mxu0 0.0
    %1849 = vmatprep.subr.mxu0 0.0
    %1850 = vmatpush1.msra.mxu0 0.0
    %1851 = vmatprep.subr.mxu0 0.0
    %1852 = vmatpush1.msra.mxu0 0.0
    %1853 = vmatprep.subr.mxu0 0.0
    %1854 = vmatpush1.msra.mxu0 0.0
    %1855 = vmatprep.subr.mxu0 0.0
    %1856 = vmatpush1.msra.mxu0 0.0
    %1857 = vmatprep.subr.mxu0 0.0
    %1858 = vmatpush1.msra.mxu0 0.0
    %1859 = vmatprep.subr.mxu0 0.0
    %1860 = vmatpush1.msra.mxu0 0.0
    %1861 = vmatprep.subr.mxu0 0.0
    %1862 = vmatpush1.msra.mxu0 0.0
    %1863 = vmatprep.mubr.f32.mxu0 0.0
    %1864 = vmatmul.mubr.f32.gmra.mrb[0].mxu0 %v1788
    %v1865 = vpop.f32.mrb[0].mxu0
    %v1866 = vadd.f32 0.0, %v1865
    %v1867 = vpop.f32.mrb[0].mxu0
    %1868 = vmatprep.mubr.f32.mxu0 0.0
    %1869 = vmatmul.mubr.f32.gmra.mrb[0].mxu0 %v1791
    %v1870 = vpop.f32.mrb[0].mxu0
    %v1871 = vadd.f32 0.0, %v1870
    %v1872 = vpop.f32.mrb[0].mxu0
    %1873 = vmatprep.mubr.f32.mxu0 0.0
    %1874 = vmatmul.mubr.f32.gmra.mrb[0].mxu0 %v1794
    %v1875 = vpop.f32.mrb[0].mxu0
    %v1876 = vadd.f32 0.0, %v1875
    %v1877 = vpop.f32.mrb[0].mxu0
    %1878 = vmatprep.mubr.f32.mxu0 0.0
    %1879 = vmatmul.mubr.f32.gmra.mrb[0].mxu0 %v1797
    %v1880 = vpop.f32.mrb[0].mxu0
    %v1881 = vadd.f32 0.0, %v1880
    %v1882 = vpop.f32.mrb[0].mxu0
    %1883 = vdwg.mxu0
    %v1884 = vadd.f32 %v1779, %v1866
    %v1885 = vadd.f32 %v1780, %v1871
    %v1886 = vadd.f32 %v1781, %v1876
    %v1887 = vadd.f32 %v1782, %v1881
    %v1888 = vld [vmem:[%s20] sm:$0x1]
    %v1890 = vlaneseq
    %v1891 = vshrl.u32 %v1890, 7
    %v1892 = vsub.s32 0, %v1891
    %v1893 = vrot.slane %v1888, %v1892
    %v1895 = vadd.f32 %v1884, %v1893
    %v1896 = vadd.f32 %v1885, %v1893
    %v1897 = vadd.f32 %v1886, %v1893
    %v1898 = vadd.f32 %v1887, %v1893
    %1899 = vst.msk [vmem:[#allocation3] sm:$0xff] %vm212, %v1895
    %1900 = vst.msk [vmem:[#allocation3 + $0x8] sm:$0xff] %vm212, %v1896
    %1901 = vst.msk [vmem:[#allocation3 + $0x10] sm:$0xff] %vm212, %v1897
    %1902 = vst.msk [vmem:[#allocation3 + $0x18] sm:$0xff] %vm212, %v1898
    %v1903 = vld [vmem:[%s21] sm:$0xff]
    %v1904 = vld [vmem:[%s21 + $0x8] sm:$0xff]
    %v1905 = vld [vmem:[%s21 + $0x10] sm:$0xff]
    %v1906 = vld [vmem:[%s21 + $0x18] sm:$0xff]
    %v1907 = vld [vmem:[%s22] sm:$0x1]
    %v1909 = vlaneseq
    %v1910 = vshrl.u32 %v1909, 7
    %v1911 = vsub.s32 0, %v1910
    %v1912 = vrot.slane %v1907, %v1911
    %v1915 = vsel %vm212, %v1662, 0
    %v1918 = vsel %vm212, %v1663, 0
    %v1921 = vsel %vm212, %v1664, 0
    %v1924 = vsel %vm212, %v1665, 0
    %v1927 = vsel %vm212, %v1666, 0
    %1929 = vmatprep.subr.mxu0 0.0
    %1930 = vmatpush1.msra.mxu0 %v1903
    %1931 = vmatprep.subr.mxu0 0.0
    %1932 = vmatpush1.msra.mxu0 %v1904
    %1933 = vmatprep.subr.mxu0 0.0
    %1934 = vmatpush1.msra.mxu0 %v1905
    %1935 = vmatprep.subr.mxu0 0.0
    %1936 = vmatpush1.msra.mxu0 %v1906
    %1937 = vmatprep.subr.mxu0 0.0
    %1938 = vmatpush1.msra.mxu0 0.0
    %1939 = vmatprep.subr.mxu0 0.0
    %1940 = vmatpush1.msra.mxu0 0.0
    %1941 = vmatprep.subr.mxu0 0.0
    %1942 = vmatpush1.msra.mxu0 0.0
    %1943 = vmatprep.subr.mxu0 0.0
    %1944 = vmatpush1.msra.mxu0 0.0
    %1945 = vmatprep.subr.mxu0 0.0
    %1946 = vmatpush1.msra.mxu0 0.0
    %1947 = vmatprep.subr.mxu0 0.0
    %1948 = vmatpush1.msra.mxu0 0.0
    %1949 = vmatprep.subr.mxu0 0.0
    %1950 = vmatpush1.msra.mxu0 0.0
    %1951 = vmatprep.subr.mxu0 0.0
    %1952 = vmatpush1.msra.mxu0 0.0
    %1953 = vmatprep.subr.mxu0 0.0
    %1954 = vmatpush1.msra.mxu0 0.0
    %1955 = vmatprep.subr.mxu0 0.0
    %1956 = vmatpush1.msra.mxu0 0.0
    %1957 = vmatprep.subr.mxu0 0.0
    %1958 = vmatpush1.msra.mxu0 0.0
    %1959 = vmatprep.subr.mxu0 0.0
    %1960 = vmatpush1.msra.mxu0 0.0
    %1961 = vmatprep.subr.mxu0 0.0
    %1962 = vmatpush1.msra.mxu0 0.0
    %1963 = vmatprep.subr.mxu0 0.0
    %1964 = vmatpush1.msra.mxu0 0.0
    %1965 = vmatprep.subr.mxu0 0.0
    %1966 = vmatpush1.msra.mxu0 0.0
    %1967 = vmatprep.subr.mxu0 0.0
    %1968 = vmatpush1.msra.mxu0 0.0
    %1969 = vmatprep.subr.mxu0 0.0
    %1970 = vmatpush1.msra.mxu0 0.0
    %1971 = vmatprep.subr.mxu0 0.0
    %1972 = vmatpush1.msra.mxu0 0.0
    %1973 = vmatprep.subr.mxu0 0.0
    %1974 = vmatpush1.msra.mxu0 0.0
    %1975 = vmatprep.subr.mxu0 0.0
    %1976 = vmatpush1.msra.mxu0 0.0
    %1977 = vmatprep.subr.mxu0 0.0
    %1978 = vmatpush1.msra.mxu0 0.0
    %1979 = vmatprep.subr.mxu0 0.0
    %1980 = vmatpush1.msra.mxu0 0.0
    %1981 = vmatprep.subr.mxu0 0.0
    %1982 = vmatpush1.msra.mxu0 0.0
    %1983 = vmatprep.subr.mxu0 0.0
    %1984 = vmatpush1.msra.mxu0 0.0
    %1985 = vmatprep.subr.mxu0 0.0
    %1986 = vmatpush1.msra.mxu0 0.0
    %1987 = vmatprep.subr.mxu0 0.0
    %1988 = vmatpush1.msra.mxu0 0.0
    %1989 = vmatprep.subr.mxu0 0.0
    %1990 = vmatpush1.msra.mxu0 0.0
    %1991 = vmatprep.subr.mxu0 0.0
    %1992 = vmatpush1.msra.mxu0 0.0
    %1993 = vmatprep.mubr.f32.mxu0 0.0
    %1994 = vmatmul.mubr.f32.gmra.mrb[0].mxu0 %v1915
    %v1995 = vpop.f32.mrb[0].mxu0
    %v1996 = vadd.f32 %v1912, %v1995
    %v1997 = vpop.f32.mrb[0].mxu0
    %1998 = vmatprep.mubr.f32.mxu0 0.0
    %1999 = vmatmul.mubr.f32.gmra.mrb[0].mxu0 %v1918
    %v2000 = vpop.f32.mrb[0].mxu0
    %v2001 = vadd.f32 %v1912, %v2000
    %v2002 = vpop.f32.mrb[0].mxu0
    %2003 = vmatprep.mubr.f32.mxu0 0.0
    %2004 = vmatmul.mubr.f32.gmra.mrb[0].mxu0 %v1921
    %v2005 = vpop.f32.mrb[0].mxu0
    %v2006 = vadd.f32 %v1912, %v2005
    %v2007 = vpop.f32.mrb[0].mxu0
    %2008 = vmatprep.mubr.f32.mxu0 0.0
    %2009 = vmatmul.mubr.f32.gmra.mrb[0].mxu0 %v1924
    %v2010 = vpop.f32.mrb[0].mxu0
    %v2011 = vadd.f32 %v1912, %v2010
    %v2012 = vpop.f32.mrb[0].mxu0
    %2013 = vmatprep.mubr.f32.mxu0 0.0
    %2014 = vmatmul.mubr.f32.gmra.mrb[0].mxu0 %v1927
    %v2015 = vpop.f32.mrb[0].mxu0
    %v2016 = vadd.f32 %v1912, %v2015
    %v2017 = vpop.f32.mrb[0].mxu0
    %2018 = vdwg.mxu0
    %v2019 = vmax.f32 %v1996, 0.0
    %v2020 = vmax.f32 %v2001, 0.0
    %v2021 = vmax.f32 %v2006, 0.0
    %v2022 = vmax.f32 %v2011, 0.0
    %v2023 = vmax.f32 %v2016, 0.0
    %v2024 = vld [vmem:[%s1] sm:$0xff]
    %v2025 = vld [vmem:[%s1 + $0x8] sm:$0xff]
    %v2026 = vld [vmem:[%s1 + $0x10] sm:$0xff]
    %v2027 = vld [vmem:[%s1 + $0x18] sm:$0xff]
    %v2028 = vld [vmem:[%s1 + $0x20] sm:$0xff]
    %v2029 = vld [vmem:[%s23] sm:$0xff]
    %v2030 = vld [vmem:[%s23 + $0x8] sm:$0xff]
    %v2031 = vld [vmem:[%s23 + $0x10] sm:$0xff]
    %v2032 = vld [vmem:[%s23 + $0x18] sm:$0xff]
    %v2034 = vsel %vm212, %v2019, 0
    %v2037 = vsel %vm212, %v2020, 0
    %v2040 = vsel %vm212, %v2021, 0
    %v2043 = vsel %vm212, %v2022, 0
    %v2046 = vsel %vm212, %v2023, 0
    %2048 = vmatprep.subr.mxu0 0.0
    %2049 = vmatpush1.msra.mxu0 %v2029
    %2050 = vmatprep.subr.mxu0 0.0
    %2051 = vmatpush1.msra.mxu0 %v2030
    %2052 = vmatprep.subr.mxu0 0.0
    %2053 = vmatpush1.msra.mxu0 %v2031
    %2054 = vmatprep.subr.mxu0 0.0
    %2055 = vmatpush1.msra.mxu0 %v2032
    %2056 = vmatprep.subr.mxu0 0.0
    %2057 = vmatpush1.msra.mxu0 0.0
    %2058 = vmatprep.subr.mxu0 0.0
    %2059 = vmatpush1.msra.mxu0 0.0
    %2060 = vmatprep.subr.mxu0 0.0
    %2061 = vmatpush1.msra.mxu0 0.0
    %2062 = vmatprep.subr.mxu0 0.0
    %2063 = vmatpush1.msra.mxu0 0.0
    %2064 = vmatprep.subr.mxu0 0.0
    %2065 = vmatpush1.msra.mxu0 0.0
    %2066 = vmatprep.subr.mxu0 0.0
    %2067 = vmatpush1.msra.mxu0 0.0
    %2068 = vmatprep.subr.mxu0 0.0
    %2069 = vmatpush1.msra.mxu0 0.0
    %2070 = vmatprep.subr.mxu0 0.0
    %2071 = vmatpush1.msra.mxu0 0.0
    %2072 = vmatprep.subr.mxu0 0.0
    %2073 = vmatpush1.msra.mxu0 0.0
    %2074 = vmatprep.subr.mxu0 0.0
    %2075 = vmatpush1.msra.mxu0 0.0
    %2076 = vmatprep.subr.mxu0 0.0
    %2077 = vmatpush1.msra.mxu0 0.0
    %2078 = vmatprep.subr.mxu0 0.0
    %2079 = vmatpush1.msra.mxu0 0.0
    %2080 = vmatprep.subr.mxu0 0.0
    %2081 = vmatpush1.msra.mxu0 0.0
    %2082 = vmatprep.subr.mxu0 0.0
    %2083 = vmatpush1.msra.mxu0 0.0
    %2084 = vmatprep.subr.mxu0 0.0
    %2085 = vmatpush1.msra.mxu0 0.0
    %2086 = vmatprep.subr.mxu0 0.0
    %2087 = vmatpush1.msra.mxu0 0.0
    %2088 = vmatprep.subr.mxu0 0.0
    %2089 = vmatpush1.msra.mxu0 0.0
    %2090 = vmatprep.subr.mxu0 0.0
    %2091 = vmatpush1.msra.mxu0 0.0
    %2092 = vmatprep.subr.mxu0 0.0
    %2093 = vmatpush1.msra.mxu0 0.0
    %2094 = vmatprep.subr.mxu0 0.0
    %2095 = vmatpush1.msra.mxu0 0.0
    %2096 = vmatprep.subr.mxu0 0.0
    %2097 = vmatpush1.msra.mxu0 0.0
    %2098 = vmatprep.subr.mxu0 0.0
    %2099 = vmatpush1.msra.mxu0 0.0
    %2100 = vmatprep.subr.mxu0 0.0
    %2101 = vmatpush1.msra.mxu0 0.0
    %2102 = vmatprep.subr.mxu0 0.0
    %2103 = vmatpush1.msra.mxu0 0.0
    %2104 = vmatprep.subr.mxu0 0.0
    %2105 = vmatpush1.msra.mxu0 0.0
    %2106 = vmatprep.subr.mxu0 0.0
    %2107 = vmatpush1.msra.mxu0 0.0
    %2108 = vmatprep.subr.mxu0 0.0
    %2109 = vmatpush1.msra.mxu0 0.0
    %2110 = vmatprep.subr.mxu0 0.0
    %2111 = vmatpush1.msra.mxu0 0.0
    %2112 = vmatprep.mubr.f32.mxu0 0.0
    %2113 = vmatmul.mubr.f32.gmra.mrb[0].mxu0 %v2034
    %v2114 = vpop.f32.mrb[0].mxu0
    %v2115 = vadd.f32 0.0, %v2114
    %v2116 = vpop.f32.mrb[0].mxu0
    %2117 = vmatprep.mubr.f32.mxu0 0.0
    %2118 = vmatmul.mubr.f32.gmra.mrb[0].mxu0 %v2037
    %v2119 = vpop.f32.mrb[0].mxu0
    %v2120 = vadd.f32 0.0, %v2119
    %v2121 = vpop.f32.mrb[0].mxu0
    %2122 = vmatprep.mubr.f32.mxu0 0.0
    %2123 = vmatmul.mubr.f32.gmra.mrb[0].mxu0 %v2040
    %v2124 = vpop.f32.mrb[0].mxu0
    %v2125 = vadd.f32 0.0, %v2124
    %v2126 = vpop.f32.mrb[0].mxu0
    %2127 = vmatprep.mubr.f32.mxu0 0.0
    %2128 = vmatmul.mubr.f32.gmra.mrb[0].mxu0 %v2043
    %v2129 = vpop.f32.mrb[0].mxu0
    %v2130 = vadd.f32 0.0, %v2129
    %v2131 = vpop.f32.mrb[0].mxu0
    %2132 = vmatprep.mubr.f32.mxu0 0.0
    %2133 = vmatmul.mubr.f32.gmra.mrb[0].mxu0 %v2046
    %v2134 = vpop.f32.mrb[0].mxu0
    %v2135 = vadd.f32 0.0, %v2134
    %v2136 = vpop.f32.mrb[0].mxu0
    %2137 = vdwg.mxu0
    %v2138 = vadd.f32 %v2024, %v2115
    %v2139 = vadd.f32 %v2025, %v2120
    %v2140 = vadd.f32 %v2026, %v2125
    %v2141 = vadd.f32 %v2027, %v2130
    %v2142 = vadd.f32 %v2028, %v2135
    %v2143 = vld [vmem:[%s24] sm:$0x1]
    %v2145 = vlaneseq
    %v2146 = vshrl.u32 %v2145, 7
    %v2147 = vsub.s32 0, %v2146
    %v2148 = vrot.slane %v2143, %v2147
    %v2150 = vadd.f32 %v2138, %v2148
    %v2151 = vadd.f32 %v2139, %v2148
    %v2152 = vadd.f32 %v2140, %v2148
    %v2153 = vadd.f32 %v2141, %v2148
    %v2154 = vadd.f32 %v2142, %v2148
    %v2155 = vsel %vm212, %v2150, 0.0
    %2156 = vadd.xlane.f32.xlu0 %v2155
    %v2157 = vpop.xlane.xlu0 %2156
    %v2158 = vsel %vm212, %v2151, 0.0
    %2159 = vadd.xlane.f32.xlu0 %v2158
    %v2160 = vpop.xlane.xlu0 %2159
    %v2161 = vsel %vm212, %v2152, 0.0
    %2162 = vadd.xlane.f32.xlu0 %v2161
    %v2163 = vpop.xlane.xlu0 %2162
    %v2164 = vsel %vm212, %v2153, 0.0
    %2165 = vadd.xlane.f32.xlu0 %v2164
    %v2166 = vpop.xlane.xlu0 %2165
    %v2167 = vsel %vm212, %v2154, 0.0
    %2168 = vadd.xlane.f32.xlu0 %v2167
    %v2169 = vpop.xlane.xlu0 %2168
    %v2170 = vmul.f32 %v2157, %v768
    %v2171 = vmul.f32 %v2160, %v768
    %v2172 = vmul.f32 %v2163, %v768
    %v2173 = vmul.f32 %v2166, %v768
    %v2174 = vmul.f32 %v2169, %v768
    %v2175 = vsub.f32 %v2150, %v2170
    %v2176 = vsub.f32 %v2151, %v2171
    %v2177 = vsub.f32 %v2152, %v2172
    %v2178 = vsub.f32 %v2153, %v2173
    %v2179 = vsub.f32 %v2154, %v2174
    %v2180 = vmul.f32 %v2175, %v2175
    %v2181 = vmul.f32 %v2176, %v2176
    %v2182 = vmul.f32 %v2177, %v2177
    %v2183 = vmul.f32 %v2178, %v2178
    %v2184 = vmul.f32 %v2179, %v2179
    %v2185 = vsel %vm212, %v2180, 0.0
    %2186 = vadd.xlane.f32.xlu0 %v2185
    %v2187 = vpop.xlane.xlu0 %2186
    %v2188 = vsel %vm212, %v2181, 0.0
    %2189 = vadd.xlane.f32.xlu0 %v2188
    %v2190 = vpop.xlane.xlu0 %2189
    %v2191 = vsel %vm212, %v2182, 0.0
    %2192 = vadd.xlane.f32.xlu0 %v2191
    %v2193 = vpop.xlane.xlu0 %2192
    %v2194 = vsel %vm212, %v2183, 0.0
    %2195 = vadd.xlane.f32.xlu0 %v2194
    %v2196 = vpop.xlane.xlu0 %2195
    %v2197 = vsel %vm212, %v2184, 0.0
    %2198 = vadd.xlane.f32.xlu0 %v2197
    %v2199 = vpop.xlane.xlu0 %2198
    %v2200 = vmul.f32 %v2187, %v768
    %v2201 = vmul.f32 %v2190, %v768
    %v2202 = vmul.f32 %v2193, %v768
    %v2203 = vmul.f32 %v2196, %v768
    %v2204 = vmul.f32 %v2199, %v768
    %v2205 = vadd.f32 %v2200, 1e-05
    %v2206 = vadd.f32 %v2201, 1e-05
    %v2207 = vadd.f32 %v2202, 1e-05
    %v2208 = vadd.f32 %v2203, 1e-05
    %v2209 = vadd.f32 %v2204, 1e-05
    %v2210 = vrsqrt.pop %v2205
    %v2211 = vrsqrt.pop %v2206
    %v2212 = vrsqrt.pop %v2207
    %v2213 = vrsqrt.pop %v2208
    %v2214 = vrsqrt.pop %v2209
    %v2215 = vmul.f32 %v2175, %v2210
    %v2216 = vmul.f32 %v2176, %v2211
    %v2217 = vmul.f32 %v2177, %v2212
    %v2218 = vmul.f32 %v2178, %v2213
    %v2219 = vmul.f32 %v2179, %v2214
    %v2220 = vld [vmem:[%s25] sm:$0x1]
    %v2222 = vlaneseq
    %v2223 = vshrl.u32 %v2222, 7
    %v2224 = vsub.s32 0, %v2223
    %v2225 = vrot.slane %v2220, %v2224
    %v2227 = vmul.f32 %v2215, %v2225
    %v2228 = vmul.f32 %v2216, %v2225
    %v2229 = vmul.f32 %v2217, %v2225
    %v2230 = vmul.f32 %v2218, %v2225
    %v2231 = vmul.f32 %v2219, %v2225
    %v2232 = vld [vmem:[%s26] sm:$0x1]
    %v2234 = vlaneseq
    %v2235 = vshrl.u32 %v2234, 7
    %v2236 = vsub.s32 0, %v2235
    %v2237 = vrot.slane %v2232, %v2236
    %v2239 = vadd.f32 %v2227, %v2237
    %v2240 = vadd.f32 %v2228, %v2237
    %v2241 = vadd.f32 %v2229, %v2237
    %v2242 = vadd.f32 %v2230, %v2237
    %v2243 = vadd.f32 %v2231, %v2237
    %2244 = vst.msk [vmem:[%s28] sm:$0xff] %vm212, %v2239
    %2245 = vst.msk [vmem:[%s28 + $0x8] sm:$0xff] %vm212, %v2240
    %2246 = vst.msk [vmem:[%s28 + $0x10] sm:$0xff] %vm212, %v2241
    %2247 = vst.msk [vmem:[%s28 + $0x18] sm:$0xff] %vm212, %v2242
    %2248 = vst.msk [vmem:[%s28 + $0x20] sm:$0xff] %vm212, %v2243
    // Predicated region
    $region110: #{walk_encoder_forward.1} parent=1 // pred_check
      _
    $region111: #{walk_encoder_forward.1} parent=1 // pred_check_branch
      %2250 = sbr.rel (0) target = $region113
    $region112: #{walk_encoder_forward.1} parent=1 // pred_region
      %s2252 = ssub.s32 512, 512
      %2253 = vsyncadd [#allocation4], %s2252
      %s2254 = sshll.u32 [#allocation3], 4
      %s2255 = int_to_ptr.vmem [resolvable:$true] %s2254
      %2260 = dma.vmem_to_hbm [thread:$0]  %s2255, 512, %s27, [#allocation4], 128, 128, 8
    $region113: #{walk_encoder_forward.1} parent=1 // pred_fallthru
      _
    // Predicated region
    $region114: #{walk_encoder_forward.1} parent=1 // pred_check
      _
    $region115: #{walk_encoder_forward.1} parent=1 // pred_check_branch
      %2262 = sbr.rel (0) target = $region117
    $region116: #{walk_encoder_forward.1} parent=1 // pred_region
      _
    $region117: #{walk_encoder_forward.1} parent=1 // pred_fallthru
      _
    // Predicated region
    $region118: #{walk_encoder_forward.1} parent=1 // pred_check
      _
    $region119: #{walk_encoder_forward.1} parent=1 // pred_check_branch
      %2264 = sbr.rel (0) target = $region121
    $region120: #{walk_encoder_forward.1} parent=1 // pred_region
      %2265 = dma.done [#allocation4], 512
    $region121: #{walk_encoder_forward.1} parent=1 // pred_fallthru
      _
    // Predicated region
    $region122: #{walk_encoder_forward.1} parent=1 // pred_check
      _
    $region123: #{walk_encoder_forward.1} parent=1 // pred_check_branch
      %2267 = sbr.rel (0) target = $region125
    $region124: #{walk_encoder_forward.1} parent=1 // pred_region
      _
    $region125: #{walk_encoder_forward.1} parent=1 // pred_fallthru
      _
    %2268 = vsyncpa [#allocation4], 1

</llo_original>
